<compile_context>
chip_gen: v7x
topology: tpu7x:2x2x1
jax: 0.10.0
libtpu: 0.0.40
codegen_flags: <defaults>
</compile_context>

<pallas_src>
import jax
import jax.numpy as jnp
from jax.experimental import pallas as pl
from jax.experimental.pallas import tpu as pltpu

C_OUT_PAD = 128                    # lane-dense output-channel width
COMPUTE_DTYPE = jnp.bfloat16       # MXU operand dtype (accumulation stays f32)


# ----------------------------------------------------------------------------
# Fused kernel
# ----------------------------------------------------------------------------
def _make_fused_kernel(num_blocks, has_ds, K, L, b_tile, csub, p8, compute_dtype):
    """All TCN residual blocks + FC epilogue for one tile of b_tile sequences.

    refs: x_ref, [per block: w1, b1, w2, b2, (wd, bd)], fc_w, fc_b, o_ref, buf
    buf: (p8 + M, csub) VMEM scratch; rows [0:p8] are a zero prefix that covers
    the largest causal shift, rows [p8:] hold the current conv input.
    """
    M = b_tile * L

    def kernel(*refs):
        x_ref = refs[0]
        idx = 1
        blocks = []
        for i in range(num_blocks):
            n = 6 if has_ds[i] else 4
            blocks.append(refs[idx:idx + n])
            idx += n
        fcw_ref, fcb_ref = refs[idx], refs[idx + 1]
        o_ref = refs[idx + 2]
        buf = refs[idx + 3]

        # Within-sequence timestep index of every row of the (M, csub) tile;
        # used to zero tap rows that would read before the sequence start.
        row_in_seq = jax.lax.broadcasted_iota(jnp.int32, (M, csub), 0) % L

        # Zero the causal prefix once (8-row aligned store).
        buf[0:p8, :] = jnp.zeros((p8, csub), jnp.float32)

        def causal_conv(hn, w_ref, b_ref, d):
            """hn: (M, csub) conv input.  Returns relu(conv(hn) + b): (M, 128)."""
            buf[p8:p8 + M, :] = hn                       # aligned narrow store
            acc = None
            for k in range(K):                           # static unroll over taps
                s = (K - 1 - k) * d                      # causal shift of tap k
                if s == 0:
                    tap = hn
                else:
                    raw = buf[p8 - s:p8 - s + M, :]      # shifted read
                    # rows with timestep < s would read before the sequence
                    # start (zero prefix / previous sequence) -> force 0
                    tap = jnp.where(row_in_seq >= s, raw, 0.0)
                t = jnp.dot(tap.astype(compute_dtype), w_ref[k],
                            preferred_element_type=jnp.float32)
                acc = t if acc is None else acc + t
            return jnp.maximum(acc + b_ref[...], 0.0)

        # Input tile: (M, csub) f32; padded channel lanes are zero.
        h_n = x_ref[...]

        for i in range(num_blocks):                      # static unroll
            d = 2 ** i
            blk = blocks[i]
            w1_ref, b1_ref, w2_ref, b2_ref = blk[0], blk[1], blk[2], blk[3]

            h1 = causal_conv(h_n, w1_ref, b1_ref, d)               # (M, 128)
            h2 = causal_conv(h1[:, 0:csub], w2_ref, b2_ref, d)     # (M, 128)

            if has_ds[i]:                                # 1x1 conv residual
                wd_ref, bd_ref = blk[4], blk[5]
                res = jnp.dot(h_n.astype(compute_dtype), wd_ref[...],
                              preferred_element_type=jnp.float32) + bd_ref[...]
                res_n = res[:, 0:csub]
            else:                                        # identity residual
                res_n = h_n
            # Lanes >= real channel count are zero on both operands, so the
            # residual add / ReLU can run at the narrow width.
            h_n = jnp.maximum(h2[:, 0:csub] + res_n, 0.0)

        # FC epilogue: one lane-dense (M, 128) matmul + store over all
        # timesteps of the tile (the wrapper keeps only the last timestep and
        # lane 0).  Batching already amortizes the MXU fill/drain here.
        out = jnp.dot(h_n.astype(compute_dtype), fcw_ref[...],
                      preferred_element_type=jnp.float32) + fcb_ref[...]
        o_ref[0] = out

    return kernel


# ----------------------------------------------------------------------------
# Parameter init (PyTorch-equivalent layout, f32) + padding / casting prep
# ----------------------------------------------------------------------------
def init_params(key, input_channels, num_channels, kernel_size):
    """Conv weights stored as (K, Cin, Cout) (transposed PyTorch Conv1d)."""
    params = {"blocks": []}
    cin = input_channels
    for cout in num_channels:
        key, k1, k2, k3, k4, k5, k6 = jax.random.split(key, 7)
        block = {
            "w1": 0.1 * jax.random.normal(k1, (kernel_size, cin, cout), jnp.float32),
            "b1": 0.1 * jax.random.normal(k2, (cout,), jnp.float32),
            "w2": 0.1 * jax.random.normal(k3, (kernel_size, cout, cout), jnp.float32),
            "b2": 0.1 * jax.random.normal(k4, (cout,), jnp.float32),
        }
        if cin != cout:  # 1x1 downsample conv on the residual path
            block["wd"] = 0.1 * jax.random.normal(k5, (1, cin, cout), jnp.float32)
            block["bd"] = 0.1 * jax.random.normal(k6, (cout,), jnp.float32)
        else:
            block["wd"] = None
            block["bd"] = None
        params["blocks"].append(block)
        cin = cout
    key, kf1, kf2 = jax.random.split(key, 3)
    params["fc_w"] = 0.1 * jax.random.normal(kf1, (num_channels[-1], 1), jnp.float32)
    params["fc_b"] = 0.1 * jax.random.normal(kf2, (1,), jnp.float32)
    return params


def prepare_params(params, compute_dtype=COMPUTE_DTYPE):
    """Pad the contraction (in-channel) dims only to the sublane/packing
    granule, output-channel dims lane-dense to 128, and cast matmul weights to
    the compute dtype.  Padded rows/cols are zero, so padded lanes of every
    activation stay exactly zero through the whole network."""
    chans = [params["blocks"][0]["w1"].shape[1]] + \
            [b["w1"].shape[2] for b in params["blocks"]]
    gran = 16 if compute_dtype == jnp.bfloat16 else 8
    csub = ((max(chans) + gran - 1) // gran) * gran

    def pad_w(w):   # (K, cin, cout) -> (K, csub, 128)
        _, cin, cout = w.shape
        return jnp.pad(w, ((0, 0), (0, csub - cin),
                           (0, C_OUT_PAD - cout))).astype(compute_dtype)

    def pad_m(w):   # (cin, cout) -> (csub, 128)
        cin, cout = w.shape
        return jnp.pad(w, ((0, csub - cin),
                           (0, C_OUT_PAD - cout))).astype(compute_dtype)

    def pad_b(b):   # (cout,) -> (1, 128), kept f32 (bias add runs on the VPU)
        return jnp.pad(b, (0, C_OUT_PAD - b.shape[0])).reshape(1, C_OUT_PAD) \
                  .astype(jnp.float32)

    prepped = {"blocks": []}
    for blk in params["blocks"]:
        pb = {"w1": pad_w(blk["w1"]), "b1": pad_b(blk["b1"]),
              "w2": pad_w(blk["w2"]), "b2": pad_b(blk["b2"])}
        if blk["wd"] is not None:
            pb["wd"] = pad_m(blk["wd"][0])
            pb["bd"] = pad_b(blk["bd"])
        else:
            pb["wd"] = None
            pb["bd"] = None
        prepped["blocks"].append(pb)
    prepped["fc_w"] = pad_m(params["fc_w"])
    prepped["fc_b"] = pad_b(params["fc_b"])
    return prepped


# ----------------------------------------------------------------------------
# Forward pass (single fused pallas_call)
# ----------------------------------------------------------------------------
def tcn_model_forward(x, mask, prepped, b_tile=None):
    N, L, _ = x.shape
    blocks = prepped["blocks"]
    num_blocks = len(blocks)
    K, csub, _ = blocks[0]["w1"].shape
    compute_dtype = blocks[0]["w1"].dtype

    # causal zero-prefix rows: >= largest dilated shift, 8-row aligned
    max_shift = (K - 1) * (2 ** (num_blocks - 1))
    p8 = max(8, ((max_shift + 7) // 8) * 8)

    # ---- batch tile: fill the MXU (M = b_tile*L ~ 256 rows) but keep >= 2
    #      grid steps when the batch allows so both v7x TensorCores get work.
    if b_tile is None:
        b_tile = max(1, min(N, pl.cdiv(256, L)))
        if N >= 2:
            b_tile = min(b_tile, pl.cdiv(N, 2))
    grid = pl.cdiv(N, b_tile)
    n_pad = grid * b_tile
    M = b_tile * L

    # mask becomes an extra channel; pad channels to the sublane granule, pad
    # the batch to the tile multiple, flatten (seq, time) into matmul rows.
    h0 = jnp.concatenate([x, mask[..., None].astype(x.dtype)], axis=2)
    cin = h0.shape[2]
    h0 = jnp.pad(h0, ((0, n_pad - N), (0, 0), (0, csub - cin)))
    h0 = h0.reshape(n_pad * L, csub).astype(jnp.float32)

    args = [h0]
    in_specs = [pl.BlockSpec((M, csub), lambda g: (g, 0))]
    has_ds = []
    for blk in blocks:
        args += [blk["w1"], blk["b1"], blk["w2"], blk["b2"]]
        in_specs += [
            pl.BlockSpec((K, csub, C_OUT_PAD), lambda g: (0, 0, 0)),
            pl.BlockSpec((1, C_OUT_PAD), lambda g: (0, 0)),
            pl.BlockSpec((K, csub, C_OUT_PAD), lambda g: (0, 0, 0)),
            pl.BlockSpec((1, C_OUT_PAD), lambda g: (0, 0)),
        ]
        if blk["wd"] is not None:
            args += [blk["wd"], blk["bd"]]
            in_specs += [
                pl.BlockSpec((csub, C_OUT_PAD), lambda g: (0, 0)),
                pl.BlockSpec((1, C_OUT_PAD), lambda g: (0, 0)),
            ]
            has_ds.append(True)
        else:
            has_ds.append(False)
    args += [prepped["fc_w"], prepped["fc_b"]]
    in_specs += [
        pl.BlockSpec((csub, C_OUT_PAD), lambda g: (0, 0)),
        pl.BlockSpec((1, C_OUT_PAD), lambda g: (0, 0)),
    ]

    kernel = _make_fused_kernel(num_blocks, tuple(has_ds), K, L, b_tile, csub,
                                p8, compute_dtype)

    out = pl.pallas_call(
        kernel,
        grid=(grid,),
        in_specs=in_specs,
        out_specs=pl.BlockSpec((1, M, C_OUT_PAD), lambda g: (g, 0, 0)),
        out_shape=jax.ShapeDtypeStruct((grid, M, C_OUT_PAD), jnp.float32),
        scratch_shapes=[pltpu.VMEM((p8 + M, csub), jnp.float32)],
        compiler_params=pltpu.CompilerParams(dimension_semantics=("parallel",)),
    )(*args)

    # per-timestep FC output -> keep the last timestep of each real sequence;
    # the real scalar lives in lane 0 of the lane-dense store.
    out = out.reshape(n_pad, L, C_OUT_PAD)
    return out[:N, L - 1, 0:1]


# ----------------------------------------------------------------------------
# Pure-JAX reference (same semantics, all f32) for an in-script check
# ----------------------------------------------------------------------------
def _ref_causal_conv(h, w, b, d):
    K, _, _ = w.shape
    L = h.shape[1]
    hp = jnp.pad(h, ((0, 0), ((K - 1) * d, 0), (0, 0)))
    acc = 0.0
    for k in range(K):
        acc = acc + jnp.einsum("nlc,co->nlo", hp[:, k * d:k * d + L, :], w[k])
    return acc + b


def tcn_model_reference(x, mask, params):
    h = jnp.concatenate([x, mask[..., None].astype(x.dtype)], axis=2)
    for i, blk in enumerate(params["blocks"]):
        d = 2 ** i
        h1 = jax.nn.relu(_ref_causal_conv(h, blk["w1"], blk["b1"], d))
        h2 = jax.nn.relu(_ref_causal_conv(h1, blk["w2"], blk["b2"], d))
        res = h if blk["wd"] is None else _ref_causal_conv(h, blk["wd"], blk["bd"], 1)
        h = jax.nn.relu(h2 + res)
    return h[:, -1, :] @ params["fc_w"] + params["fc_b"]


# ----------------------------------------------------------------------------
if __name__ == "__main__":
    batch, seq_len = 8, 16
    input_channels = 4          # 3 features + 1 mask channel
    num_channels = [8, 8]
    kernel_size = 3
    # dropout = 0.1 -> identity at inference; weight-norm assumed pre-fused.

    key = jax.random.PRNGKey(0)
    kx, km, kp = jax.random.split(key, 3)
    x = jax.random.normal(kx, (batch, seq_len, input_channels - 1), jnp.float32)
    mask = (jax.random.uniform(km, (batch, seq_len)) > 0.5).astype(jnp.float32)

    params = init_params(kp, input_channels, num_channels, kernel_size)
    prepped = prepare_params(params)

    fwd = jax.jit(tcn_model_forward)
    out = fwd(x, mask, prepped)
    jax.block_until_ready(out)

    assert out.shape == (batch, 1), out.shape
    assert out.dtype == jnp.float32

    ref = tcn_model_reference(x, mask, params)
    # bf16 matmul operands -> loose-ish tolerance against the all-f32 reference
    assert jnp.allclose(out, ref, rtol=2e-2, atol=2e-2), (out, ref)

    print("KERNEL_OK")
</pallas_src>

<mosaic_0001>
module attributes {stable_mosaic.version = 11 : i64} {
  func.func @kernel(%arg0: i32, %arg1: memref<64x16xf32, #tpu.memory_space<vmem>>, %arg2: memref<3x16x128xbf16, #tpu.memory_space<vmem>>, %arg3: memref<1x128xf32, #tpu.memory_space<vmem>>, %arg4: memref<3x16x128xbf16, #tpu.memory_space<vmem>>, %arg5: memref<1x128xf32, #tpu.memory_space<vmem>>, %arg6: memref<16x128xbf16, #tpu.memory_space<vmem>>, %arg7: memref<1x128xf32, #tpu.memory_space<vmem>>, %arg8: memref<3x16x128xbf16, #tpu.memory_space<vmem>>, %arg9: memref<1x128xf32, #tpu.memory_space<vmem>>, %arg10: memref<3x16x128xbf16, #tpu.memory_space<vmem>>, %arg11: memref<1x128xf32, #tpu.memory_space<vmem>>, %arg12: memref<16x128xbf16, #tpu.memory_space<vmem>>, %arg13: memref<1x128xf32, #tpu.memory_space<vmem>>, %arg14: memref<1x64x128xf32, #tpu.memory_space<vmem>>, %arg15: memref<72x16xf32, #tpu.memory_space<vmem>>) attributes {dimension_semantics = [#tpu.dimension_semantics<parallel>], iteration_bounds = array<i64: 2>, scalar_prefetch = 0 : i64, scratch_operands = 1 : i64, tpu.core_type = #tpu.core_type<tc>, window_params = [{transform_indices = @transform_0, window_bounds = array<i64: 64, 16>}, {pipeline_mode = #tpu.pipeline_mode<synchronous>, transform_indices = @transform_1, window_bounds = array<i64: 3, 16, 128>}, {pipeline_mode = #tpu.pipeline_mode<synchronous>, transform_indices = @transform_2, window_bounds = array<i64: 1, 128>}, {pipeline_mode = #tpu.pipeline_mode<synchronous>, transform_indices = @transform_3, window_bounds = array<i64: 3, 16, 128>}, {pipeline_mode = #tpu.pipeline_mode<synchronous>, transform_indices = @transform_4, window_bounds = array<i64: 1, 128>}, {pipeline_mode = #tpu.pipeline_mode<synchronous>, transform_indices = @transform_5, window_bounds = array<i64: 16, 128>}, {pipeline_mode = #tpu.pipeline_mode<synchronous>, transform_indices = @transform_6, window_bounds = array<i64: 1, 128>}, {pipeline_mode = #tpu.pipeline_mode<synchronous>, transform_indices = @transform_7, window_bounds = array<i64: 3, 16, 128>}, {pipeline_mode = #tpu.pipeline_mode<synchronous>, transform_indices = @transform_8, window_bounds = array<i64: 1, 128>}, {pipeline_mode = #tpu.pipeline_mode<synchronous>, transform_indices = @transform_9, window_bounds = array<i64: 3, 16, 128>}, {pipeline_mode = #tpu.pipeline_mode<synchronous>, transform_indices = @transform_10, window_bounds = array<i64: 1, 128>}, {pipeline_mode = #tpu.pipeline_mode<synchronous>, transform_indices = @transform_11, window_bounds = array<i64: 16, 128>}, {pipeline_mode = #tpu.pipeline_mode<synchronous>, transform_indices = @transform_12, window_bounds = array<i64: 1, 128>}, {transform_indices = @transform_13, window_bounds = array<i64: 1, 64, 128>}]} {
    %0 = tpu.iota {dimensions = array<i32: 0>} : vector<64x16xi32>
    %c16_i32 = arith.constant 16 : i32
    %c0_i32 = arith.constant 0 : i32
    %1 = arith.cmpi eq, %c16_i32, %c0_i32 : i32
    %c1_i32 = arith.constant 1 : i32
    %2 = arith.select %1, %c1_i32, %c16_i32 : i32
    %3 = vector.broadcast %2 : i32 to vector<64x16xi32>
    %4 = arith.remsi %0, %3 : vector<64x16xi32>
    %c0_i32_0 = arith.constant 0 : i32
    %5 = vector.broadcast %c0_i32_0 : i32 to vector<64x16xi32>
    %6 = arith.cmpi ne, %4, %5 : vector<64x16xi32>
    %c0_i32_1 = arith.constant 0 : i32
    %7 = vector.broadcast %c0_i32_1 : i32 to vector<64x16xi32>
    %8 = arith.cmpi slt, %4, %7 : vector<64x16xi32>
    %c0_i32_2 = arith.constant 0 : i32
    %9 = arith.cmpi slt, %2, %c0_i32_2 : i32
    %10 = vector.broadcast %9 : i1 to vector<64x16xi1>
    %11 = vector.broadcast %10 : vector<64x16xi1> to vector<64x16xi1>
    %12 = arith.xori %8, %11 : vector<64x16xi1>
    %13 = arith.andi %12, %6 : vector<64x16xi1>
    %14 = vector.broadcast %2 : i32 to vector<64x16xi32>
    %15 = arith.addi %4, %14 : vector<64x16xi32>
    %16 = arith.select %13, %15, %4 : vector<64x16xi1>, vector<64x16xi32>
    %cst = arith.constant 0.000000e+00 : f32
    %17 = vector.broadcast %cst : f32 to vector<8x16xf32>
    %c0 = arith.constant 0 : index
    %c0_3 = arith.constant 0 : index
    %18 = vector.load %arg15[%c0, %c0_3] : memref<72x16xf32, #tpu.memory_space<vmem>>, vector<8x16xf32>
    tpu.vector_store %arg15[%c0, %c0_3], %17 {strides = array<i32>} : memref<72x16xf32, #tpu.memory_space<vmem>>, vector<8x16xf32>,
    %c0_4 = arith.constant 0 : index
    %c0_5 = arith.constant 0 : index
    %19 = vector.load %arg1[%c0_4, %c0_5] : memref<64x16xf32, #tpu.memory_space<vmem>>, vector<64x16xf32>
    %c8 = arith.constant 8 : index
    %c0_6 = arith.constant 0 : index
    %20 = vector.load %arg15[%c8, %c0_6] : memref<72x16xf32, #tpu.memory_space<vmem>>, vector<64x16xf32>
    tpu.vector_store %arg15[%c8, %c0_6], %19 {strides = array<i32>} : memref<72x16xf32, #tpu.memory_space<vmem>>, vector<64x16xf32>,
    %c6 = arith.constant 6 : index
    %c0_7 = arith.constant 0 : index
    %21 = vector.load %arg15[%c6, %c0_7] : memref<72x16xf32, #tpu.memory_space<vmem>>, vector<64x16xf32>
    %c2_i32 = arith.constant 2 : i32
    %22 = vector.broadcast %c2_i32 : i32 to vector<64x16xi32>
    %23 = arith.cmpi sge, %16, %22 : vector<64x16xi32>
    %cst_8 = arith.constant 0.000000e+00 : f32
    %24 = vector.broadcast %cst_8 : f32 to vector<64x16xf32>
    %25 = arith.select %23, %21, %24 : vector<64x16xi1>, vector<64x16xf32>
    %26 = arith.truncf %25 : vector<64x16xf32> to vector<64x16xbf16>
    %c0_9 = arith.constant 0 : index
    %c0_10 = arith.constant 0 : index
    %c0_11 = arith.constant 0 : index
    %27 = vector.load %arg2[%c0_9, %c0_10, %c0_11] : memref<3x16x128xbf16, #tpu.memory_space<vmem>>, vector<1x16x128xbf16>
    %28 = vector.shape_cast %27 : vector<1x16x128xbf16> to vector<16x128xbf16>
    %cst_12 = arith.constant dense<0.000000e+00> : vector<64x128xf32>
    %29 = tpu.matmul %26, %28, %cst_12 {dimension_numbers = #tpu.dot_dimension_numbers<[1], [0], [0], [1], [0, 0, 1, 1], [], []>} : vector<64x16xbf16>, vector<16x128xbf16>, vector<64x128xf32> -> vector<64x128xf32>
    %c7 = arith.constant 7 : index
    %c0_13 = arith.constant 0 : index
    %30 = vector.load %arg15[%c7, %c0_13] : memref<72x16xf32, #tpu.memory_space<vmem>>, vector<64x16xf32>
    %c1_i32_14 = arith.constant 1 : i32
    %31 = vector.broadcast %c1_i32_14 : i32 to vector<64x16xi32>
    %32 = arith.cmpi sge, %16, %31 : vector<64x16xi32>
    %cst_15 = arith.constant 0.000000e+00 : f32
    %33 = vector.broadcast %cst_15 : f32 to vector<64x16xf32>
    %34 = arith.select %32, %30, %33 : vector<64x16xi1>, vector<64x16xf32>
    %35 = arith.truncf %34 : vector<64x16xf32> to vector<64x16xbf16>
    %c1 = arith.constant 1 : index
    %c0_16 = arith.constant 0 : index
    %c0_17 = arith.constant 0 : index
    %36 = vector.load %arg2[%c1, %c0_16, %c0_17] : memref<3x16x128xbf16, #tpu.memory_space<vmem>>, vector<1x16x128xbf16>
    %37 = vector.shape_cast %36 : vector<1x16x128xbf16> to vector<16x128xbf16>
    %cst_18 = arith.constant dense<0.000000e+00> : vector<64x128xf32>
    %38 = tpu.matmul %35, %37, %cst_18 {dimension_numbers = #tpu.dot_dimension_numbers<[1], [0], [0], [1], [0, 0, 1, 1], [], []>} : vector<64x16xbf16>, vector<16x128xbf16>, vector<64x128xf32> -> vector<64x128xf32>
    %39 = arith.addf %29, %38 : vector<64x128xf32>
    %40 = arith.truncf %19 : vector<64x16xf32> to vector<64x16xbf16>
    %c2 = arith.constant 2 : index
    %c0_19 = arith.constant 0 : index
    %c0_20 = arith.constant 0 : index
    %41 = vector.load %arg2[%c2, %c0_19, %c0_20] : memref<3x16x128xbf16, #tpu.memory_space<vmem>>, vector<1x16x128xbf16>
    %42 = vector.shape_cast %41 : vector<1x16x128xbf16> to vector<16x128xbf16>
    %cst_21 = arith.constant dense<0.000000e+00> : vector<64x128xf32>
    %43 = tpu.matmul %40, %42, %cst_21 {dimension_numbers = #tpu.dot_dimension_numbers<[1], [0], [0], [1], [0, 0, 1, 1], [], []>} : vector<64x16xbf16>, vector<16x128xbf16>, vector<64x128xf32> -> vector<64x128xf32>
    %44 = arith.addf %39, %43 : vector<64x128xf32>
    %c0_22 = arith.constant 0 : index
    %c0_23 = arith.constant 0 : index
    %45 = vector.load %arg3[%c0_22, %c0_23] : memref<1x128xf32, #tpu.memory_space<vmem>>, vector<1x128xf32>
    %46 = vector.broadcast %45 : vector<1x128xf32> to vector<64x128xf32>
    %47 = arith.addf %44, %46 : vector<64x128xf32>
    %cst_24 = arith.constant 0.000000e+00 : f32
    %48 = vector.broadcast %cst_24 : f32 to vector<64x128xf32>
    %49 = arith.maximumf %47, %48 : vector<64x128xf32>
    %50 = vector.extract_strided_slice %49 {offsets = [0, 0], sizes = [64, 16], strides = [1, 1]} : vector<64x128xf32> to vector<64x16xf32>
    %c8_25 = arith.constant 8 : index
    %c0_26 = arith.constant 0 : index
    %51 = vector.load %arg15[%c8_25, %c0_26] : memref<72x16xf32, #tpu.memory_space<vmem>>, vector<64x16xf32>
    tpu.vector_store %arg15[%c8_25, %c0_26], %50 {strides = array<i32>} : memref<72x16xf32, #tpu.memory_space<vmem>>, vector<64x16xf32>,
    %c6_27 = arith.constant 6 : index
    %c0_28 = arith.constant 0 : index
    %52 = vector.load %arg15[%c6_27, %c0_28] : memref<72x16xf32, #tpu.memory_space<vmem>>, vector<64x16xf32>
    %c2_i32_29 = arith.constant 2 : i32
    %53 = vector.broadcast %c2_i32_29 : i32 to vector<64x16xi32>
    %54 = arith.cmpi sge, %16, %53 : vector<64x16xi32>
    %cst_30 = arith.constant 0.000000e+00 : f32
    %55 = vector.broadcast %cst_30 : f32 to vector<64x16xf32>
    %56 = arith.select %54, %52, %55 : vector<64x16xi1>, vector<64x16xf32>
    %57 = arith.truncf %56 : vector<64x16xf32> to vector<64x16xbf16>
    %c0_31 = arith.constant 0 : index
    %c0_32 = arith.constant 0 : index
    %c0_33 = arith.constant 0 : index
    %58 = vector.load %arg4[%c0_31, %c0_32, %c0_33] : memref<3x16x128xbf16, #tpu.memory_space<vmem>>, vector<1x16x128xbf16>
    %59 = vector.shape_cast %58 : vector<1x16x128xbf16> to vector<16x128xbf16>
    %cst_34 = arith.constant dense<0.000000e+00> : vector<64x128xf32>
    %60 = tpu.matmul %57, %59, %cst_34 {dimension_numbers = #tpu.dot_dimension_numbers<[1], [0], [0], [1], [0, 0, 1, 1], [], []>} : vector<64x16xbf16>, vector<16x128xbf16>, vector<64x128xf32> -> vector<64x128xf32>
    %c7_35 = arith.constant 7 : index
    %c0_36 = arith.constant 0 : index
    %61 = vector.load %arg15[%c7_35, %c0_36] : memref<72x16xf32, #tpu.memory_space<vmem>>, vector<64x16xf32>
    %c1_i32_37 = arith.constant 1 : i32
    %62 = vector.broadcast %c1_i32_37 : i32 to vector<64x16xi32>
    %63 = arith.cmpi sge, %16, %62 : vector<64x16xi32>
    %cst_38 = arith.constant 0.000000e+00 : f32
    %64 = vector.broadcast %cst_38 : f32 to vector<64x16xf32>
    %65 = arith.select %63, %61, %64 : vector<64x16xi1>, vector<64x16xf32>
    %66 = arith.truncf %65 : vector<64x16xf32> to vector<64x16xbf16>
    %c1_39 = arith.constant 1 : index
    %c0_40 = arith.constant 0 : index
    %c0_41 = arith.constant 0 : index
    %67 = vector.load %arg4[%c1_39, %c0_40, %c0_41] : memref<3x16x128xbf16, #tpu.memory_space<vmem>>, vector<1x16x128xbf16>
    %68 = vector.shape_cast %67 : vector<1x16x128xbf16> to vector<16x128xbf16>
    %cst_42 = arith.constant dense<0.000000e+00> : vector<64x128xf32>
    %69 = tpu.matmul %66, %68, %cst_42 {dimension_numbers = #tpu.dot_dimension_numbers<[1], [0], [0], [1], [0, 0, 1, 1], [], []>} : vector<64x16xbf16>, vector<16x128xbf16>, vector<64x128xf32> -> vector<64x128xf32>
    %70 = arith.addf %60, %69 : vector<64x128xf32>
    %71 = arith.truncf %50 : vector<64x16xf32> to vector<64x16xbf16>
    %c2_43 = arith.constant 2 : index
    %c0_44 = arith.constant 0 : index
    %c0_45 = arith.constant 0 : index
    %72 = vector.load %arg4[%c2_43, %c0_44, %c0_45] : memref<3x16x128xbf16, #tpu.memory_space<vmem>>, vector<1x16x128xbf16>
    %73 = vector.shape_cast %72 : vector<1x16x128xbf16> to vector<16x128xbf16>
    %cst_46 = arith.constant dense<0.000000e+00> : vector<64x128xf32>
    %74 = tpu.matmul %71, %73, %cst_46 {dimension_numbers = #tpu.dot_dimension_numbers<[1], [0], [0], [1], [0, 0, 1, 1], [], []>} : vector<64x16xbf16>, vector<16x128xbf16>, vector<64x128xf32> -> vector<64x128xf32>
    %75 = arith.addf %70, %74 : vector<64x128xf32>
    %c0_47 = arith.constant 0 : index
    %c0_48 = arith.constant 0 : index
    %76 = vector.load %arg5[%c0_47, %c0_48] : memref<1x128xf32, #tpu.memory_space<vmem>>, vector<1x128xf32>
    %77 = vector.broadcast %76 : vector<1x128xf32> to vector<64x128xf32>
    %78 = arith.addf %75, %77 : vector<64x128xf32>
    %cst_49 = arith.constant 0.000000e+00 : f32
    %79 = vector.broadcast %cst_49 : f32 to vector<64x128xf32>
    %80 = arith.maximumf %78, %79 : vector<64x128xf32>
    %81 = arith.truncf %19 : vector<64x16xf32> to vector<64x16xbf16>
    %c0_50 = arith.constant 0 : index
    %c0_51 = arith.constant 0 : index
    %82 = vector.load %arg6[%c0_50, %c0_51] : memref<16x128xbf16, #tpu.memory_space<vmem>>, vector<16x128xbf16>
    %cst_52 = arith.constant dense<0.000000e+00> : vector<64x128xf32>
    %83 = tpu.matmul %81, %82, %cst_52 {dimension_numbers = #tpu.dot_dimension_numbers<[1], [0], [0], [1], [0, 0, 1, 1], [], []>} : vector<64x16xbf16>, vector<16x128xbf16>, vector<64x128xf32> -> vector<64x128xf32>
    %c0_53 = arith.constant 0 : index
    %c0_54 = arith.constant 0 : index
    %84 = vector.load %arg7[%c0_53, %c0_54] : memref<1x128xf32, #tpu.memory_space<vmem>>, vector<1x128xf32>
    %85 = vector.broadcast %84 : vector<1x128xf32> to vector<64x128xf32>
    %86 = arith.addf %83, %85 : vector<64x128xf32>
    %87 = vector.extract_strided_slice %86 {offsets = [0, 0], sizes = [64, 16], strides = [1, 1]} : vector<64x128xf32> to vector<64x16xf32>
    %88 = vector.extract_strided_slice %80 {offsets = [0, 0], sizes = [64, 16], strides = [1, 1]} : vector<64x128xf32> to vector<64x16xf32>
    %89 = arith.addf %88, %87 : vector<64x16xf32>
    %cst_55 = arith.constant 0.000000e+00 : f32
    %90 = vector.broadcast %cst_55 : f32 to vector<64x16xf32>
    %91 = arith.maximumf %89, %90 : vector<64x16xf32>
    %c8_56 = arith.constant 8 : index
    %c0_57 = arith.constant 0 : index
    %92 = vector.load %arg15[%c8_56, %c0_57] : memref<72x16xf32, #tpu.memory_space<vmem>>, vector<64x16xf32>
    tpu.vector_store %arg15[%c8_56, %c0_57], %91 {strides = array<i32>} : memref<72x16xf32, #tpu.memory_space<vmem>>, vector<64x16xf32>,
    %c4 = arith.constant 4 : index
    %c0_58 = arith.constant 0 : index
    %93 = vector.load %arg15[%c4, %c0_58] : memref<72x16xf32, #tpu.memory_space<vmem>>, vector<64x16xf32>
    %c4_i32 = arith.constant 4 : i32
    %94 = vector.broadcast %c4_i32 : i32 to vector<64x16xi32>
    %95 = arith.cmpi sge, %16, %94 : vector<64x16xi32>
    %cst_59 = arith.constant 0.000000e+00 : f32
    %96 = vector.broadcast %cst_59 : f32 to vector<64x16xf32>
    %97 = arith.select %95, %93, %96 : vector<64x16xi1>, vector<64x16xf32>
    %98 = arith.truncf %97 : vector<64x16xf32> to vector<64x16xbf16>
    %c0_60 = arith.constant 0 : index
    %c0_61 = arith.constant 0 : index
    %c0_62 = arith.constant 0 : index
    %99 = vector.load %arg8[%c0_60, %c0_61, %c0_62] : memref<3x16x128xbf16, #tpu.memory_space<vmem>>, vector<1x16x128xbf16>
    %100 = vector.shape_cast %99 : vector<1x16x128xbf16> to vector<16x128xbf16>
    %cst_63 = arith.constant dense<0.000000e+00> : vector<64x128xf32>
    %101 = tpu.matmul %98, %100, %cst_63 {dimension_numbers = #tpu.dot_dimension_numbers<[1], [0], [0], [1], [0, 0, 1, 1], [], []>} : vector<64x16xbf16>, vector<16x128xbf16>, vector<64x128xf32> -> vector<64x128xf32>
    %c6_64 = arith.constant 6 : index
    %c0_65 = arith.constant 0 : index
    %102 = vector.load %arg15[%c6_64, %c0_65] : memref<72x16xf32, #tpu.memory_space<vmem>>, vector<64x16xf32>
    %c2_i32_66 = arith.constant 2 : i32
    %103 = vector.broadcast %c2_i32_66 : i32 to vector<64x16xi32>
    %104 = arith.cmpi sge, %16, %103 : vector<64x16xi32>
    %cst_67 = arith.constant 0.000000e+00 : f32
    %105 = vector.broadcast %cst_67 : f32 to vector<64x16xf32>
    %106 = arith.select %104, %102, %105 : vector<64x16xi1>, vector<64x16xf32>
    %107 = arith.truncf %106 : vector<64x16xf32> to vector<64x16xbf16>
    %c1_68 = arith.constant 1 : index
    %c0_69 = arith.constant 0 : index
    %c0_70 = arith.constant 0 : index
    %108 = vector.load %arg8[%c1_68, %c0_69, %c0_70] : memref<3x16x128xbf16, #tpu.memory_space<vmem>>, vector<1x16x128xbf16>
    %109 = vector.shape_cast %108 : vector<1x16x128xbf16> to vector<16x128xbf16>
    %cst_71 = arith.constant dense<0.000000e+00> : vector<64x128xf32>
    %110 = tpu.matmul %107, %109, %cst_71 {dimension_numbers = #tpu.dot_dimension_numbers<[1], [0], [0], [1], [0, 0, 1, 1], [], []>} : vector<64x16xbf16>, vector<16x128xbf16>, vector<64x128xf32> -> vector<64x128xf32>
    %111 = arith.addf %101, %110 : vector<64x128xf32>
    %112 = arith.truncf %91 : vector<64x16xf32> to vector<64x16xbf16>
    %c2_72 = arith.constant 2 : index
    %c0_73 = arith.constant 0 : index
    %c0_74 = arith.constant 0 : index
    %113 = vector.load %arg8[%c2_72, %c0_73, %c0_74] : memref<3x16x128xbf16, #tpu.memory_space<vmem>>, vector<1x16x128xbf16>
    %114 = vector.shape_cast %113 : vector<1x16x128xbf16> to vector<16x128xbf16>
    %cst_75 = arith.constant dense<0.000000e+00> : vector<64x128xf32>
    %115 = tpu.matmul %112, %114, %cst_75 {dimension_numbers = #tpu.dot_dimension_numbers<[1], [0], [0], [1], [0, 0, 1, 1], [], []>} : vector<64x16xbf16>, vector<16x128xbf16>, vector<64x128xf32> -> vector<64x128xf32>
    %116 = arith.addf %111, %115 : vector<64x128xf32>
    %c0_76 = arith.constant 0 : index
    %c0_77 = arith.constant 0 : index
    %117 = vector.load %arg9[%c0_76, %c0_77] : memref<1x128xf32, #tpu.memory_space<vmem>>, vector<1x128xf32>
    %118 = vector.broadcast %117 : vector<1x128xf32> to vector<64x128xf32>
    %119 = arith.addf %116, %118 : vector<64x128xf32>
    %cst_78 = arith.constant 0.000000e+00 : f32
    %120 = vector.broadcast %cst_78 : f32 to vector<64x128xf32>
    %121 = arith.maximumf %119, %120 : vector<64x128xf32>
    %122 = vector.extract_strided_slice %121 {offsets = [0, 0], sizes = [64, 16], strides = [1, 1]} : vector<64x128xf32> to vector<64x16xf32>
    %c8_79 = arith.constant 8 : index
    %c0_80 = arith.constant 0 : index
    %123 = vector.load %arg15[%c8_79, %c0_80] : memref<72x16xf32, #tpu.memory_space<vmem>>, vector<64x16xf32>
    tpu.vector_store %arg15[%c8_79, %c0_80], %122 {strides = array<i32>} : memref<72x16xf32, #tpu.memory_space<vmem>>, vector<64x16xf32>,
    %c4_81 = arith.constant 4 : index
    %c0_82 = arith.constant 0 : index
    %124 = vector.load %arg15[%c4_81, %c0_82] : memref<72x16xf32, #tpu.memory_space<vmem>>, vector<64x16xf32>
    %c4_i32_83 = arith.constant 4 : i32
    %125 = vector.broadcast %c4_i32_83 : i32 to vector<64x16xi32>
    %126 = arith.cmpi sge, %16, %125 : vector<64x16xi32>
    %cst_84 = arith.constant 0.000000e+00 : f32
    %127 = vector.broadcast %cst_84 : f32 to vector<64x16xf32>
    %128 = arith.select %126, %124, %127 : vector<64x16xi1>, vector<64x16xf32>
    %129 = arith.truncf %128 : vector<64x16xf32> to vector<64x16xbf16>
    %c0_85 = arith.constant 0 : index
    %c0_86 = arith.constant 0 : index
    %c0_87 = arith.constant 0 : index
    %130 = vector.load %arg10[%c0_85, %c0_86, %c0_87] : memref<3x16x128xbf16, #tpu.memory_space<vmem>>, vector<1x16x128xbf16>
    %131 = vector.shape_cast %130 : vector<1x16x128xbf16> to vector<16x128xbf16>
    %cst_88 = arith.constant dense<0.000000e+00> : vector<64x128xf32>
    %132 = tpu.matmul %129, %131, %cst_88 {dimension_numbers = #tpu.dot_dimension_numbers<[1], [0], [0], [1], [0, 0, 1, 1], [], []>} : vector<64x16xbf16>, vector<16x128xbf16>, vector<64x128xf32> -> vector<64x128xf32>
    %c6_89 = arith.constant 6 : index
    %c0_90 = arith.constant 0 : index
    %133 = vector.load %arg15[%c6_89, %c0_90] : memref<72x16xf32, #tpu.memory_space<vmem>>, vector<64x16xf32>
    %c2_i32_91 = arith.constant 2 : i32
    %134 = vector.broadcast %c2_i32_91 : i32 to vector<64x16xi32>
    %135 = arith.cmpi sge, %16, %134 : vector<64x16xi32>
    %cst_92 = arith.constant 0.000000e+00 : f32
    %136 = vector.broadcast %cst_92 : f32 to vector<64x16xf32>
    %137 = arith.select %135, %133, %136 : vector<64x16xi1>, vector<64x16xf32>
    %138 = arith.truncf %137 : vector<64x16xf32> to vector<64x16xbf16>
    %c1_93 = arith.constant 1 : index
    %c0_94 = arith.constant 0 : index
    %c0_95 = arith.constant 0 : index
    %139 = vector.load %arg10[%c1_93, %c0_94, %c0_95] : memref<3x16x128xbf16, #tpu.memory_space<vmem>>, vector<1x16x128xbf16>
    %140 = vector.shape_cast %139 : vector<1x16x128xbf16> to vector<16x128xbf16>
    %cst_96 = arith.constant dense<0.000000e+00> : vector<64x128xf32>
    %141 = tpu.matmul %138, %140, %cst_96 {dimension_numbers = #tpu.dot_dimension_numbers<[1], [0], [0], [1], [0, 0, 1, 1], [], []>} : vector<64x16xbf16>, vector<16x128xbf16>, vector<64x128xf32> -> vector<64x128xf32>
    %142 = arith.addf %132, %141 : vector<64x128xf32>
    %143 = arith.truncf %122 : vector<64x16xf32> to vector<64x16xbf16>
    %c2_97 = arith.constant 2 : index
    %c0_98 = arith.constant 0 : index
    %c0_99 = arith.constant 0 : index
    %144 = vector.load %arg10[%c2_97, %c0_98, %c0_99] : memref<3x16x128xbf16, #tpu.memory_space<vmem>>, vector<1x16x128xbf16>
    %145 = vector.shape_cast %144 : vector<1x16x128xbf16> to vector<16x128xbf16>
    %cst_100 = arith.constant dense<0.000000e+00> : vector<64x128xf32>
    %146 = tpu.matmul %143, %145, %cst_100 {dimension_numbers = #tpu.dot_dimension_numbers<[1], [0], [0], [1], [0, 0, 1, 1], [], []>} : vector<64x16xbf16>, vector<16x128xbf16>, vector<64x128xf32> -> vector<64x128xf32>
    %147 = arith.addf %142, %146 : vector<64x128xf32>
    %c0_101 = arith.constant 0 : index
    %c0_102 = arith.constant 0 : index
    %148 = vector.load %arg11[%c0_101, %c0_102] : memref<1x128xf32, #tpu.memory_space<vmem>>, vector<1x128xf32>
    %149 = vector.broadcast %148 : vector<1x128xf32> to vector<64x128xf32>
    %150 = arith.addf %147, %149 : vector<64x128xf32>
    %cst_103 = arith.constant 0.000000e+00 : f32
    %151 = vector.broadcast %cst_103 : f32 to vector<64x128xf32>
    %152 = arith.maximumf %150, %151 : vector<64x128xf32>
    %153 = vector.extract_strided_slice %152 {offsets = [0, 0], sizes = [64, 16], strides = [1, 1]} : vector<64x128xf32> to vector<64x16xf32>
    %154 = arith.addf %153, %91 : vector<64x16xf32>
    %cst_104 = arith.constant 0.000000e+00 : f32
    %155 = vector.broadcast %cst_104 : f32 to vector<64x16xf32>
    %156 = arith.maximumf %154, %155 : vector<64x16xf32>
    %157 = arith.truncf %156 : vector<64x16xf32> to vector<64x16xbf16>
    %c0_105 = arith.constant 0 : index
    %c0_106 = arith.constant 0 : index
    %158 = vector.load %arg12[%c0_105, %c0_106] : memref<16x128xbf16, #tpu.memory_space<vmem>>, vector<16x128xbf16>
    %cst_107 = arith.constant dense<0.000000e+00> : vector<64x128xf32>
    %159 = tpu.matmul %157, %158, %cst_107 {dimension_numbers = #tpu.dot_dimension_numbers<[1], [0], [0], [1], [0, 0, 1, 1], [], []>} : vector<64x16xbf16>, vector<16x128xbf16>, vector<64x128xf32> -> vector<64x128xf32>
    %c0_108 = arith.constant 0 : index
    %c0_109 = arith.constant 0 : index
    %160 = vector.load %arg13[%c0_108, %c0_109] : memref<1x128xf32, #tpu.memory_space<vmem>>, vector<1x128xf32>
    %161 = vector.broadcast %160 : vector<1x128xf32> to vector<64x128xf32>
    %162 = arith.addf %159, %161 : vector<64x128xf32>
    %c0_110 = arith.constant 0 : index
    %c0_111 = arith.constant 0 : index
    %c0_112 = arith.constant 0 : index
    %163 = vector.load %arg14[%c0_110, %c0_111, %c0_112] : memref<1x64x128xf32, #tpu.memory_space<vmem>>, vector<1x64x128xf32>
    %164 = vector.shape_cast %163 : vector<1x64x128xf32> to vector<64x128xf32>
    %165 = vector.shape_cast %162 : vector<64x128xf32> to vector<1x64x128xf32>
    tpu.vector_store %arg14[%c0_110, %c0_111, %c0_112], %165 {strides = array<i32>} : memref<1x64x128xf32, #tpu.memory_space<vmem>>, vector<1x64x128xf32>,
    return
  }
  func.func @transform_0(%arg0: i32) -> (i32, i32) {
    %c0_i32 = arith.constant 0 : i32
    %c0_i32_0 = arith.constant 0 : i32
    return %arg0, %c0_i32 : i32, i32
  }
  func.func @transform_1(%arg0: i32) -> (i32, i32, i32) {
    %c0_i32 = arith.constant 0 : i32
    %c0_i32_0 = arith.constant 0 : i32
    %c0_i32_1 = arith.constant 0 : i32
    %c0_i32_2 = arith.constant 0 : i32
    return %c0_i32, %c0_i32_0, %c0_i32_1 : i32, i32, i32
  }
  func.func @transform_2(%arg0: i32) -> (i32, i32) {
    %c0_i32 = arith.constant 0 : i32
    %c0_i32_0 = arith.constant 0 : i32
    %c0_i32_1 = arith.constant 0 : i32
    return %c0_i32, %c0_i32_0 : i32, i32
  }
  func.func @transform_3(%arg0: i32) -> (i32, i32, i32) {
    %c0_i32 = arith.constant 0 : i32
    %c0_i32_0 = arith.constant 0 : i32
    %c0_i32_1 = arith.constant 0 : i32
    %c0_i32_2 = arith.constant 0 : i32
    return %c0_i32, %c0_i32_0, %c0_i32_1 : i32, i32, i32
  }
  func.func @transform_4(%arg0: i32) -> (i32, i32) {
    %c0_i32 = arith.constant 0 : i32
    %c0_i32_0 = arith.constant 0 : i32
    %c0_i32_1 = arith.constant 0 : i32
    return %c0_i32, %c0_i32_0 : i32, i32
  }
  func.func @transform_5(%arg0: i32) -> (i32, i32) {
    %c0_i32 = arith.constant 0 : i32
    %c0_i32_0 = arith.constant 0 : i32
    %c0_i32_1 = arith.constant 0 : i32
    return %c0_i32, %c0_i32_0 : i32, i32
  }
  func.func @transform_6(%arg0: i32) -> (i32, i32) {
    %c0_i32 = arith.constant 0 : i32
    %c0_i32_0 = arith.constant 0 : i32
    %c0_i32_1 = arith.constant 0 : i32
    return %c0_i32, %c0_i32_0 : i32, i32
  }
  func.func @transform_7(%arg0: i32) -> (i32, i32, i32) {
    %c0_i32 = arith.constant 0 : i32
    %c0_i32_0 = arith.constant 0 : i32
    %c0_i32_1 = arith.constant 0 : i32
    %c0_i32_2 = arith.constant 0 : i32
    return %c0_i32, %c0_i32_0, %c0_i32_1 : i32, i32, i32
  }
  func.func @transform_8(%arg0: i32) -> (i32, i32) {
    %c0_i32 = arith.constant 0 : i32
    %c0_i32_0 = arith.constant 0 : i32
    %c0_i32_1 = arith.constant 0 : i32
    return %c0_i32, %c0_i32_0 : i32, i32
  }
  func.func @transform_9(%arg0: i32) -> (i32, i32, i32) {
    %c0_i32 = arith.constant 0 : i32
    %c0_i32_0 = arith.constant 0 : i32
    %c0_i32_1 = arith.constant 0 : i32
    %c0_i32_2 = arith.constant 0 : i32
    return %c0_i32, %c0_i32_0, %c0_i32_1 : i32, i32, i32
  }
  func.func @transform_10(%arg0: i32) -> (i32, i32) {
    %c0_i32 = arith.constant 0 : i32
    %c0_i32_0 = arith.constant 0 : i32
    %c0_i32_1 = arith.constant 0 : i32
    return %c0_i32, %c0_i32_0 : i32, i32
  }
  func.func @transform_11(%arg0: i32) -> (i32, i32) {
    %c0_i32 = arith.constant 0 : i32
    %c0_i32_0 = arith.constant 0 : i32
    %c0_i32_1 = arith.constant 0 : i32
    return %c0_i32, %c0_i32_0 : i32, i32
  }
  func.func @transform_12(%arg0: i32) -> (i32, i32) {
    %c0_i32 = arith.constant 0 : i32
    %c0_i32_0 = arith.constant 0 : i32
    %c0_i32_1 = arith.constant 0 : i32
    return %c0_i32, %c0_i32_0 : i32, i32
  }
  func.func @transform_13(%arg0: i32) -> (i32, i32, i32) {
    %c0_i32 = arith.constant 0 : i32
    %c0_i32_0 = arith.constant 0 : i32
    %c0_i32_1 = arith.constant 0 : i32
    return %arg0, %c0_i32, %c0_i32_0 : i32, i32, i32
  }
}

</mosaic_0001>

<llo_original>
// kernel: tcn_model_forward.1
$region0: #{tcn_model_forward.1}
  #allocation0 [shape = 'u32[]', space=smem, size = 0x4, offset = 0x4, fixed_abs, tag = 'smem constant byte address 0x4 - core index']
  #allocation1 [shape = 'u32[144,128]{1,0:T(1,128)}', space=vmem, size = 0x12000, scoped, tag = 'internal scratch']
  #allocation2 [shape = 'f32[72,16]{1,0:T(8,128)}', space=vmem, size = 0x9000, scoped, tag = 'scratch operand']
  %s0 = inlined_call_operand.vmem [shape: f32[128,16], index: 0, kind: input, shape index: {}]
  %s1 = inlined_call_operand.vmem [shape: bf16[3,16,128], index: 1, kind: input, shape index: {}]
  %s2 = inlined_call_operand.vmem [shape: f32[1,128], index: 2, kind: input, shape index: {}]
  %s3 = inlined_call_operand.vmem [shape: bf16[3,16,128], index: 3, kind: input, shape index: {}]
  %s4 = inlined_call_operand.vmem [shape: f32[1,128], index: 4, kind: input, shape index: {}]
  %s5 = inlined_call_operand.vmem [shape: bf16[16,128], index: 5, kind: input, shape index: {}]
  %s6 = inlined_call_operand.vmem [shape: f32[1,128], index: 6, kind: input, shape index: {}]
  %s7 = inlined_call_operand.vmem [shape: bf16[3,16,128], index: 7, kind: input, shape index: {}]
  %s8 = inlined_call_operand.vmem [shape: f32[1,128], index: 8, kind: input, shape index: {}]
  %s9 = inlined_call_operand.vmem [shape: bf16[3,16,128], index: 9, kind: input, shape index: {}]
  %s10 = inlined_call_operand.vmem [shape: f32[1,128], index: 10, kind: input, shape index: {}]
  %s11 = inlined_call_operand.vmem [shape: bf16[16,128], index: 11, kind: input, shape index: {}]
  %s12 = inlined_call_operand.vmem [shape: f32[1,128], index: 12, kind: input, shape index: {}]
  %s13 = inlined_call_operand.vmem [shape: f32[2,64,128], index: 13, kind: output, shape index: {}]
  %s14 = sld [smem:[#allocation0]]
  $region85: #{tcn_model_forward.1} parent=0
    _
  %s16 = ssub.s32 1, %s14
  %s17 = scalar_select 0, %s16, %s14
  loop: start=0, step=1, limit=4
  $region2: #{tcn_model_forward.1} parent=0 // loop_pre_header
    _
  $region3: #{tcn_model_forward.1} parent=0 // loop_header
    %s19 = sphi 0, %s23
    %p20 = scmp.ge.s32.totalorder %s19, 4
    %s29 = sphi 0, %s31
    %s32 = sphi 0, %s29
    %s33 = sphi 0, %s32
    %s49 = sphi 0, %s33
    %s53 = sphi 0, %s53
    %s55 = sphi 0, %s53
    %s56 = sphi 0, %s55
    %s70 = sphi 0, %s56
    %s74 = sphi 0, %s74
    %s76 = sphi 0, %s74
    %s77 = sphi 0, %s76
    %s91 = sphi 0, %s77
    %s95 = sphi 0, %s95
    %s97 = sphi 0, %s95
    %s98 = sphi 0, %s97
    %s112 = sphi 0, %s98
    %s116 = sphi 0, %s116
    %s118 = sphi 0, %s116
    %s119 = sphi 0, %s118
    %s133 = sphi 0, %s119
    %s137 = sphi 0, %s137
    %s139 = sphi 0, %s137
    %s140 = sphi 0, %s139
    %s154 = sphi 0, %s140
    %s158 = sphi 0, %s158
    %s160 = sphi 0, %s158
    %s161 = sphi 0, %s160
    %s175 = sphi 0, %s161
    %s179 = sphi 0, %s179
    %s181 = sphi 0, %s179
    %s182 = sphi 0, %s181
    %s196 = sphi 0, %s182
    %s200 = sphi 0, %s200
    %s202 = sphi 0, %s200
    %s203 = sphi 0, %s202
    %s217 = sphi 0, %s203
    %s221 = sphi 0, %s221
    %s223 = sphi 0, %s221
    %s224 = sphi 0, %s223
    %s238 = sphi 0, %s224
    %s242 = sphi 0, %s242
    %s244 = sphi 0, %s242
    %s245 = sphi 0, %s244
    %s259 = sphi 0, %s245
    %s263 = sphi 0, %s263
    %s265 = sphi 0, %s263
    %s266 = sphi 0, %s265
    %s280 = sphi 0, %s266
    %s284 = sphi 0, %s284
    %s286 = sphi 0, %s284
    %s287 = sphi 0, %s286
    %s301 = sphi 0, %s287
    %s307 = sphi 0, %s309
    %s310 = sphi 0, %s307
    %s311 = sphi 0, %s310
    %s327 = sphi 0, %s311
  $region4: #{tcn_model_forward.1} parent=0 // loop_header_branch
    %22 = sbr.rel (%p20) target = $region8
  $region5: #{tcn_model_forward.1} parent=0 // loop_body
    %s24 = ssub.s32 %s19, 1
    %s25 = ssub.s32 %s19, 2
    %s26 = sadd.s32 %s19, 1
    %s27 = ssub.s32 %s19, %s26
    %p28 = scmp.eq.s32.totalorder %s27, 0
    %s30 = sadd.s32 %s29, 1
    %s31 = scalar_select %p28, %s29, %s30
    %p34 = pneg %p28
    %p35 = scmp.eq.s32.totalorder %s19, 1
    %p36 = por %p34, %p35
    %p37 = scmp.ne.s32.totalorder %s29, %s32
    %p38 = scmp.eq.s32.totalorder %s19, 0
    %p39 = por %p37, %p38
    %p40 = scmp.ne.s32.totalorder %s29, %s32
    %p41 = scmp.eq.s32.totalorder %s24, 1
    %p42 = por %p40, %p41
    %p43 = scmp.ne.s32.totalorder %s32, %s33
    %p44 = scmp.eq.s32.totalorder %s24, 0
    %p45 = por %p43, %p44
    %p46 = scmp.ne.s32.totalorder %s32, %s33
    %p47 = scmp.eq.s32.totalorder %s25, 1
    %p48 = por %p46, %p47
    %p50 = scmp.ne.s32.totalorder %s33, %s49
    %p51 = scmp.eq.s32.totalorder %s25, 0
    %p52 = por %p50, %p51
    %s54 = sadd.s32 %s53, 1
    %p57 = scmp.eq.s32.totalorder %s19, 1
    %p58 = scmp.ne.s32.totalorder %s53, %s55
    %p59 = scmp.eq.s32.totalorder %s19, 0
    %p60 = por %p58, %p59
    %p61 = scmp.ne.s32.totalorder %s53, %s55
    %p62 = scmp.eq.s32.totalorder %s24, 1
    %p63 = por %p61, %p62
    %p64 = scmp.ne.s32.totalorder %s55, %s56
    %p65 = scmp.eq.s32.totalorder %s24, 0
    %p66 = por %p64, %p65
    %p67 = scmp.ne.s32.totalorder %s55, %s56
    %p68 = scmp.eq.s32.totalorder %s25, 1
    %p69 = por %p67, %p68
    %p71 = scmp.ne.s32.totalorder %s56, %s70
    %p72 = scmp.eq.s32.totalorder %s25, 0
    %p73 = por %p71, %p72
    %s75 = sadd.s32 %s74, 1
    %p78 = scmp.eq.s32.totalorder %s19, 1
    %p79 = scmp.ne.s32.totalorder %s74, %s76
    %p80 = scmp.eq.s32.totalorder %s19, 0
    %p81 = por %p79, %p80
    %p82 = scmp.ne.s32.totalorder %s74, %s76
    %p83 = scmp.eq.s32.totalorder %s24, 1
    %p84 = por %p82, %p83
    %p85 = scmp.ne.s32.totalorder %s76, %s77
    %p86 = scmp.eq.s32.totalorder %s24, 0
    %p87 = por %p85, %p86
    %p88 = scmp.ne.s32.totalorder %s76, %s77
    %p89 = scmp.eq.s32.totalorder %s25, 1
    %p90 = por %p88, %p89
    %p92 = scmp.ne.s32.totalorder %s77, %s91
    %p93 = scmp.eq.s32.totalorder %s25, 0
    %p94 = por %p92, %p93
    %s96 = sadd.s32 %s95, 1
    %p99 = scmp.eq.s32.totalorder %s19, 1
    %p100 = scmp.ne.s32.totalorder %s95, %s97
    %p101 = scmp.eq.s32.totalorder %s19, 0
    %p102 = por %p100, %p101
    %p103 = scmp.ne.s32.totalorder %s95, %s97
    %p104 = scmp.eq.s32.totalorder %s24, 1
    %p105 = por %p103, %p104
    %p106 = scmp.ne.s32.totalorder %s97, %s98
    %p107 = scmp.eq.s32.totalorder %s24, 0
    %p108 = por %p106, %p107
    %p109 = scmp.ne.s32.totalorder %s97, %s98
    %p110 = scmp.eq.s32.totalorder %s25, 1
    %p111 = por %p109, %p110
    %p113 = scmp.ne.s32.totalorder %s98, %s112
    %p114 = scmp.eq.s32.totalorder %s25, 0
    %p115 = por %p113, %p114
    %s117 = sadd.s32 %s116, 1
    %p120 = scmp.eq.s32.totalorder %s19, 1
    %p121 = scmp.ne.s32.totalorder %s116, %s118
    %p122 = scmp.eq.s32.totalorder %s19, 0
    %p123 = por %p121, %p122
    %p124 = scmp.ne.s32.totalorder %s116, %s118
    %p125 = scmp.eq.s32.totalorder %s24, 1
    %p126 = por %p124, %p125
    %p127 = scmp.ne.s32.totalorder %s118, %s119
    %p128 = scmp.eq.s32.totalorder %s24, 0
    %p129 = por %p127, %p128
    %p130 = scmp.ne.s32.totalorder %s118, %s119
    %p131 = scmp.eq.s32.totalorder %s25, 1
    %p132 = por %p130, %p131
    %p134 = scmp.ne.s32.totalorder %s119, %s133
    %p135 = scmp.eq.s32.totalorder %s25, 0
    %p136 = por %p134, %p135
    %s138 = sadd.s32 %s137, 1
    %p141 = scmp.eq.s32.totalorder %s19, 1
    %p142 = scmp.ne.s32.totalorder %s137, %s139
    %p143 = scmp.eq.s32.totalorder %s19, 0
    %p144 = por %p142, %p143
    %p145 = scmp.ne.s32.totalorder %s137, %s139
    %p146 = scmp.eq.s32.totalorder %s24, 1
    %p147 = por %p145, %p146
    %p148 = scmp.ne.s32.totalorder %s139, %s140
    %p149 = scmp.eq.s32.totalorder %s24, 0
    %p150 = por %p148, %p149
    %p151 = scmp.ne.s32.totalorder %s139, %s140
    %p152 = scmp.eq.s32.totalorder %s25, 1
    %p153 = por %p151, %p152
    %p155 = scmp.ne.s32.totalorder %s140, %s154
    %p156 = scmp.eq.s32.totalorder %s25, 0
    %p157 = por %p155, %p156
    %s159 = sadd.s32 %s158, 1
    %p162 = scmp.eq.s32.totalorder %s19, 1
    %p163 = scmp.ne.s32.totalorder %s158, %s160
    %p164 = scmp.eq.s32.totalorder %s19, 0
    %p165 = por %p163, %p164
    %p166 = scmp.ne.s32.totalorder %s158, %s160
    %p167 = scmp.eq.s32.totalorder %s24, 1
    %p168 = por %p166, %p167
    %p169 = scmp.ne.s32.totalorder %s160, %s161
    %p170 = scmp.eq.s32.totalorder %s24, 0
    %p171 = por %p169, %p170
    %p172 = scmp.ne.s32.totalorder %s160, %s161
    %p173 = scmp.eq.s32.totalorder %s25, 1
    %p174 = por %p172, %p173
    %p176 = scmp.ne.s32.totalorder %s161, %s175
    %p177 = scmp.eq.s32.totalorder %s25, 0
    %p178 = por %p176, %p177
    %s180 = sadd.s32 %s179, 1
    %p183 = scmp.eq.s32.totalorder %s19, 1
    %p184 = scmp.ne.s32.totalorder %s179, %s181
    %p185 = scmp.eq.s32.totalorder %s19, 0
    %p186 = por %p184, %p185
    %p187 = scmp.ne.s32.totalorder %s179, %s181
    %p188 = scmp.eq.s32.totalorder %s24, 1
    %p189 = por %p187, %p188
    %p190 = scmp.ne.s32.totalorder %s181, %s182
    %p191 = scmp.eq.s32.totalorder %s24, 0
    %p192 = por %p190, %p191
    %p193 = scmp.ne.s32.totalorder %s181, %s182
    %p194 = scmp.eq.s32.totalorder %s25, 1
    %p195 = por %p193, %p194
    %p197 = scmp.ne.s32.totalorder %s182, %s196
    %p198 = scmp.eq.s32.totalorder %s25, 0
    %p199 = por %p197, %p198
    %s201 = sadd.s32 %s200, 1
    %p204 = scmp.eq.s32.totalorder %s19, 1
    %p205 = scmp.ne.s32.totalorder %s200, %s202
    %p206 = scmp.eq.s32.totalorder %s19, 0
    %p207 = por %p205, %p206
    %p208 = scmp.ne.s32.totalorder %s200, %s202
    %p209 = scmp.eq.s32.totalorder %s24, 1
    %p210 = por %p208, %p209
    %p211 = scmp.ne.s32.totalorder %s202, %s203
    %p212 = scmp.eq.s32.totalorder %s24, 0
    %p213 = por %p211, %p212
    %p214 = scmp.ne.s32.totalorder %s202, %s203
    %p215 = scmp.eq.s32.totalorder %s25, 1
    %p216 = por %p214, %p215
    %p218 = scmp.ne.s32.totalorder %s203, %s217
    %p219 = scmp.eq.s32.totalorder %s25, 0
    %p220 = por %p218, %p219
    %s222 = sadd.s32 %s221, 1
    %p225 = scmp.eq.s32.totalorder %s19, 1
    %p226 = scmp.ne.s32.totalorder %s221, %s223
    %p227 = scmp.eq.s32.totalorder %s19, 0
    %p228 = por %p226, %p227
    %p229 = scmp.ne.s32.totalorder %s221, %s223
    %p230 = scmp.eq.s32.totalorder %s24, 1
    %p231 = por %p229, %p230
    %p232 = scmp.ne.s32.totalorder %s223, %s224
    %p233 = scmp.eq.s32.totalorder %s24, 0
    %p234 = por %p232, %p233
    %p235 = scmp.ne.s32.totalorder %s223, %s224
    %p236 = scmp.eq.s32.totalorder %s25, 1
    %p237 = por %p235, %p236
    %p239 = scmp.ne.s32.totalorder %s224, %s238
    %p240 = scmp.eq.s32.totalorder %s25, 0
    %p241 = por %p239, %p240
    %s243 = sadd.s32 %s242, 1
    %p246 = scmp.eq.s32.totalorder %s19, 1
    %p247 = scmp.ne.s32.totalorder %s242, %s244
    %p248 = scmp.eq.s32.totalorder %s19, 0
    %p249 = por %p247, %p248
    %p250 = scmp.ne.s32.totalorder %s242, %s244
    %p251 = scmp.eq.s32.totalorder %s24, 1
    %p252 = por %p250, %p251
    %p253 = scmp.ne.s32.totalorder %s244, %s245
    %p254 = scmp.eq.s32.totalorder %s24, 0
    %p255 = por %p253, %p254
    %p256 = scmp.ne.s32.totalorder %s244, %s245
    %p257 = scmp.eq.s32.totalorder %s25, 1
    %p258 = por %p256, %p257
    %p260 = scmp.ne.s32.totalorder %s245, %s259
    %p261 = scmp.eq.s32.totalorder %s25, 0
    %p262 = por %p260, %p261
    %s264 = sadd.s32 %s263, 1
    %p267 = scmp.eq.s32.totalorder %s19, 1
    %p268 = scmp.ne.s32.totalorder %s263, %s265
    %p269 = scmp.eq.s32.totalorder %s19, 0
    %p270 = por %p268, %p269
    %p271 = scmp.ne.s32.totalorder %s263, %s265
    %p272 = scmp.eq.s32.totalorder %s24, 1
    %p273 = por %p271, %p272
    %p274 = scmp.ne.s32.totalorder %s265, %s266
    %p275 = scmp.eq.s32.totalorder %s24, 0
    %p276 = por %p274, %p275
    %p277 = scmp.ne.s32.totalorder %s265, %s266
    %p278 = scmp.eq.s32.totalorder %s25, 1
    %p279 = por %p277, %p278
    %p281 = scmp.ne.s32.totalorder %s266, %s280
    %p282 = scmp.eq.s32.totalorder %s25, 0
    %p283 = por %p281, %p282
    %s285 = sadd.s32 %s284, 1
    %p288 = scmp.eq.s32.totalorder %s19, 1
    %p289 = scmp.ne.s32.totalorder %s284, %s286
    %p290 = scmp.eq.s32.totalorder %s19, 0
    %p291 = por %p289, %p290
    %p292 = scmp.ne.s32.totalorder %s284, %s286
    %p293 = scmp.eq.s32.totalorder %s24, 1
    %p294 = por %p292, %p293
    %p295 = scmp.ne.s32.totalorder %s286, %s287
    %p296 = scmp.eq.s32.totalorder %s24, 0
    %p297 = por %p295, %p296
    %p298 = scmp.ne.s32.totalorder %s286, %s287
    %p299 = scmp.eq.s32.totalorder %s25, 1
    %p300 = por %p298, %p299
    %p302 = scmp.ne.s32.totalorder %s287, %s301
    %p303 = scmp.eq.s32.totalorder %s25, 0
    %p304 = por %p302, %p303
    %s305 = ssub.s32 %s19, %s26
    %p306 = scmp.eq.s32.totalorder %s305, 0
    %s308 = sadd.s32 %s307, 1
    %s309 = scalar_select %p306, %s307, %s308
    %p312 = pneg %p306
    %p313 = scmp.eq.s32.totalorder %s19, 1
    %p314 = por %p312, %p313
    %p315 = scmp.ne.s32.totalorder %s307, %s310
    %p316 = scmp.eq.s32.totalorder %s19, 0
    %p317 = por %p315, %p316
    %p318 = scmp.ne.s32.totalorder %s307, %s310
    %p319 = scmp.eq.s32.totalorder %s24, 1
    %p320 = por %p318, %p319
    %p321 = scmp.ne.s32.totalorder %s310, %s311
    %p322 = scmp.eq.s32.totalorder %s24, 0
    %p323 = por %p321, %p322
    %p324 = scmp.ne.s32.totalorder %s310, %s311
    %p325 = scmp.eq.s32.totalorder %s25, 1
    %p326 = por %p324, %p325
    %p328 = scmp.ne.s32.totalorder %s311, %s327
    %p329 = scmp.eq.s32.totalorder %s25, 0
    %p330 = por %p328, %p329
    %p331 = scmp.le.s32.totalorder 1, %s19
    %p332 = scmp.lt.s32.totalorder %s19, 3
    %p333 = pnand %p331, %p332
    %p334 = pneg %p333
    // Predicated region
    $region9: #{tcn_model_forward.1} parent=5 // pred_check
      _
    $region10: #{tcn_model_forward.1} parent=5 // pred_check_branch
      %336 = sbr.rel (%p333) target = $region12
    $region11: #{tcn_model_forward.1} parent=5 // pred_region
      %s337 = ssub.s32 %s19, 1
      // Predicated region
      $region13: #{tcn_model_forward.1} parent=11 // pred_check
        %p338 = pneg %p66
      $region14: #{tcn_model_forward.1} parent=11 // pred_check_branch
        %340 = sbr.rel (%p338) target = $region16
      $region15: #{tcn_model_forward.1} parent=11 // pred_region
        _
      $region16: #{tcn_model_forward.1} parent=11 // pred_fallthru
        _
      // Predicated region
      $region17: #{tcn_model_forward.1} parent=11 // pred_check
        %p341 = pneg %p87
      $region18: #{tcn_model_forward.1} parent=11 // pred_check_branch
        %343 = sbr.rel (%p341) target = $region20
      $region19: #{tcn_model_forward.1} parent=11 // pred_region
        _
      $region20: #{tcn_model_forward.1} parent=11 // pred_fallthru
        _
      // Predicated region
      $region21: #{tcn_model_forward.1} parent=11 // pred_check
        %p344 = pneg %p108
      $region22: #{tcn_model_forward.1} parent=11 // pred_check_branch
        %346 = sbr.rel (%p344) target = $region24
      $region23: #{tcn_model_forward.1} parent=11 // pred_region
        _
      $region24: #{tcn_model_forward.1} parent=11 // pred_fallthru
        _
      // Predicated region
      $region25: #{tcn_model_forward.1} parent=11 // pred_check
        %p347 = pneg %p129
      $region26: #{tcn_model_forward.1} parent=11 // pred_check_branch
        %349 = sbr.rel (%p347) target = $region28
      $region27: #{tcn_model_forward.1} parent=11 // pred_region
        _
      $region28: #{tcn_model_forward.1} parent=11 // pred_fallthru
        _
      // Predicated region
      $region29: #{tcn_model_forward.1} parent=11 // pred_check
        %p350 = pneg %p150
      $region30: #{tcn_model_forward.1} parent=11 // pred_check_branch
        %352 = sbr.rel (%p350) target = $region32
      $region31: #{tcn_model_forward.1} parent=11 // pred_region
        _
      $region32: #{tcn_model_forward.1} parent=11 // pred_fallthru
        _
      // Predicated region
      $region33: #{tcn_model_forward.1} parent=11 // pred_check
        %p353 = pneg %p171
      $region34: #{tcn_model_forward.1} parent=11 // pred_check_branch
        %355 = sbr.rel (%p353) target = $region36
      $region35: #{tcn_model_forward.1} parent=11 // pred_region
        _
      $region36: #{tcn_model_forward.1} parent=11 // pred_fallthru
        _
      // Predicated region
      $region37: #{tcn_model_forward.1} parent=11 // pred_check
        %p356 = pneg %p192
      $region38: #{tcn_model_forward.1} parent=11 // pred_check_branch
        %358 = sbr.rel (%p356) target = $region40
      $region39: #{tcn_model_forward.1} parent=11 // pred_region
        _
      $region40: #{tcn_model_forward.1} parent=11 // pred_fallthru
        _
      // Predicated region
      $region41: #{tcn_model_forward.1} parent=11 // pred_check
        %p359 = pneg %p213
      $region42: #{tcn_model_forward.1} parent=11 // pred_check_branch
        %361 = sbr.rel (%p359) target = $region44
      $region43: #{tcn_model_forward.1} parent=11 // pred_region
        _
      $region44: #{tcn_model_forward.1} parent=11 // pred_fallthru
        _
      // Predicated region
      $region45: #{tcn_model_forward.1} parent=11 // pred_check
        %p362 = pneg %p234
      $region46: #{tcn_model_forward.1} parent=11 // pred_check_branch
        %364 = sbr.rel (%p362) target = $region48
      $region47: #{tcn_model_forward.1} parent=11 // pred_region
        _
      $region48: #{tcn_model_forward.1} parent=11 // pred_fallthru
        _
      // Predicated region
      $region49: #{tcn_model_forward.1} parent=11 // pred_check
        %p365 = pneg %p255
      $region50: #{tcn_model_forward.1} parent=11 // pred_check_branch
        %367 = sbr.rel (%p365) target = $region52
      $region51: #{tcn_model_forward.1} parent=11 // pred_region
        _
      $region52: #{tcn_model_forward.1} parent=11 // pred_fallthru
        _
      // Predicated region
      $region53: #{tcn_model_forward.1} parent=11 // pred_check
        %p368 = pneg %p276
      $region54: #{tcn_model_forward.1} parent=11 // pred_check_branch
        %370 = sbr.rel (%p368) target = $region56
      $region55: #{tcn_model_forward.1} parent=11 // pred_region
        _
      $region56: #{tcn_model_forward.1} parent=11 // pred_fallthru
        _
      // Predicated region
      $region57: #{tcn_model_forward.1} parent=11 // pred_check
        %p371 = pneg %p297
      $region58: #{tcn_model_forward.1} parent=11 // pred_check_branch
        %373 = sbr.rel (%p371) target = $region60
      $region59: #{tcn_model_forward.1} parent=11 // pred_region
        _
      $region60: #{tcn_model_forward.1} parent=11 // pred_fallthru
        _
    $region12: #{tcn_model_forward.1} parent=5 // pred_fallthru
      _
    %p374 = scmp.lt.s32.totalorder %s19, 2
    // Predicated region
    $region61: #{tcn_model_forward.1} parent=5 // pred_check
      %p375 = pneg %p374
    $region62: #{tcn_model_forward.1} parent=5 // pred_check_branch
      %377 = sbr.rel (%p375) target = $region64
    $region63: #{tcn_model_forward.1} parent=5 // pred_region
      // Predicated region
      $region65: #{tcn_model_forward.1} parent=63 // pred_check
        %p378 = pneg %p39
      $region66: #{tcn_model_forward.1} parent=63 // pred_check_branch
        %380 = sbr.rel (%p378) target = $region68
      $region67: #{tcn_model_forward.1} parent=63 // pred_region
        %s381 = smul.u32 8, %s19
        %p382 = scmp.lt.s32.totalorder %s381, 15
        %s383 = scalar_select %p382, %s381, 15
        %s384 = smul.addr %s383, 8
        %s385 = scalar_lea.vmem %s0, %s384
        %s386 = smul.u32 8, %s19
      $region68: #{tcn_model_forward.1} parent=63 // pred_fallthru
        _
    $region64: #{tcn_model_forward.1} parent=5 // pred_fallthru
      _
    %p387 = scmp.le.s32.totalorder 1, %s19
    %p388 = scmp.lt.s32.totalorder %s19, 3
    %p389 = pnand %p387, %p388
    %p390 = pneg %p389
    // Predicated region
    $region69: #{tcn_model_forward.1} parent=5 // pred_check
      _
    $region70: #{tcn_model_forward.1} parent=5 // pred_check_branch
      %392 = sbr.rel (%p389) target = $region72
    $region71: #{tcn_model_forward.1} parent=5 // pred_region
      %s393 = ssub.s32 %s19, 1
      %s394 = smul.u32 8, %s24
      %p395 = scmp.lt.s32.totalorder %s394, 15
      %s396 = scalar_select %p395, %s394, 15
      %s397 = smul.addr %s396, 8
      %s398 = scalar_lea.vmem %s0, %s397
      %p399 = pneg %p45
      %p400 = pneg %p42
      %p401 = pneg %p66
      %p402 = pneg %p63
      %p403 = pneg %p87
      %p404 = pneg %p84
      %p405 = pneg %p108
      %p406 = pneg %p105
      %p407 = pneg %p129
      %p408 = pneg %p126
      %p409 = pneg %p150
      %p410 = pneg %p147
      %p411 = pneg %p171
      %p412 = pneg %p168
      %p413 = pneg %p192
      %p414 = pneg %p189
      %p415 = pneg %p213
      %p416 = pneg %p210
      %p417 = pneg %p234
      %p418 = pneg %p231
      %p419 = pneg %p255
      %p420 = pneg %p252
      %p421 = pneg %p276
      %p422 = pneg %p273
      %p423 = pneg %p297
      %p424 = pneg %p294
      %p425 = pneg %p323
      %p426 = pneg %p320
      %p427 = scmp.lt.s32.totalorder %s24, 1
      %s428 = scalar_select %p427, %s24, 1
      %s429 = smul.addr %s428, 8
      %s430 = smul.addr %s429, 8
      %s431 = scalar_lea.vmem %s13, %s430
      %s432 = smul.u32 8, %s24
      %p433 = scmp.lt.s32.totalorder %s432, 15
      %s434 = scalar_select %p433, %s432, 15
      %s435 = smul.addr %s434, 8
      %s436 = scalar_lea.vmem %s0, %s435
      %s437 = smul.u32 8, %s24
      %p438 = scmp.lt.s32.totalorder %s24, 1
      %s439 = scalar_select %p438, %s24, 1
      %s440 = smul.addr %s439, 8
      %s441 = smul.addr %s440, 8
      %s442 = scalar_lea.vmem %s13, %s441
      %v444 = vlaneseq
      %v445 = vshrl.u32 %v444, 7
      %v446 = vadd.s32 %v445, 8
      %v447 = vadd.s32 %v445, 16
      %v448 = vadd.s32 %v445, 24
      %v449 = vadd.s32 %v445, 32
      %v450 = vadd.s32 %v445, 40
      %v451 = vadd.s32 %v445, 48
      %v452 = vadd.s32 %v445, 56
      %vm453 = vcmp.lt.s32.totalorder %v445, 0
      %v454 = vsub.s32 0, %v445
      %v455 = vsel %vm453, %v454, %v445
      %v456 = vshrl.u32 %v455, 4
      %v457 = vand.u32 %v455, 15
      %v458 = vsub.s32 0, %v457
      %v459 = vsel %vm453, %v458, %v457
      %vm460 = vcmp.lt.s32.totalorder %v446, 0
      %v461 = vsub.s32 0, %v446
      %v462 = vsel %vm460, %v461, %v446
      %v463 = vshrl.u32 %v462, 4
      %v464 = vand.u32 %v462, 15
      %v465 = vsub.s32 0, %v464
      %v466 = vsel %vm460, %v465, %v464
      %vm467 = vcmp.lt.s32.totalorder %v447, 0
      %v468 = vsub.s32 0, %v447
      %v469 = vsel %vm467, %v468, %v447
      %v470 = vshrl.u32 %v469, 4
      %v471 = vand.u32 %v469, 15
      %v472 = vsub.s32 0, %v471
      %v473 = vsel %vm467, %v472, %v471
      %vm474 = vcmp.lt.s32.totalorder %v448, 0
      %v475 = vsub.s32 0, %v448
      %v476 = vsel %vm474, %v475, %v448
      %v477 = vshrl.u32 %v476, 4
      %v478 = vand.u32 %v476, 15
      %v479 = vsub.s32 0, %v478
      %v480 = vsel %vm474, %v479, %v478
      %vm481 = vcmp.lt.s32.totalorder %v449, 0
      %v482 = vsub.s32 0, %v449
      %v483 = vsel %vm481, %v482, %v449
      %v484 = vshrl.u32 %v483, 4
      %v485 = vand.u32 %v483, 15
      %v486 = vsub.s32 0, %v485
      %v487 = vsel %vm481, %v486, %v485
      %vm488 = vcmp.lt.s32.totalorder %v450, 0
      %v489 = vsub.s32 0, %v450
      %v490 = vsel %vm488, %v489, %v450
      %v491 = vshrl.u32 %v490, 4
      %v492 = vand.u32 %v490, 15
      %v493 = vsub.s32 0, %v492
      %v494 = vsel %vm488, %v493, %v492
      %vm495 = vcmp.lt.s32.totalorder %v451, 0
      %v496 = vsub.s32 0, %v451
      %v497 = vsel %vm495, %v496, %v451
      %v498 = vshrl.u32 %v497, 4
      %v499 = vand.u32 %v497, 15
      %v500 = vsub.s32 0, %v499
      %v501 = vsel %vm495, %v500, %v499
      %vm502 = vcmp.lt.s32.totalorder %v452, 0
      %v503 = vsub.s32 0, %v452
      %v504 = vsel %vm502, %v503, %v452
      %v505 = vshrl.u32 %v504, 4
      %v506 = vand.u32 %v504, 15
      %v507 = vsub.s32 0, %v506
      %v508 = vsel %vm502, %v507, %v506
      %vm509 = vcmp.ne.s32.totalorder %v459, 0
      %vm510 = vcmp.ne.s32.totalorder %v466, 0
      %vm511 = vcmp.ne.s32.totalorder %v473, 0
      %vm512 = vcmp.ne.s32.totalorder %v480, 0
      %vm513 = vcmp.ne.s32.totalorder %v487, 0
      %vm514 = vcmp.ne.s32.totalorder %v494, 0
      %vm515 = vcmp.ne.s32.totalorder %v501, 0
      %vm516 = vcmp.ne.s32.totalorder %v508, 0
      %vm517 = vcmp.lt.s32.totalorder %v459, 0
      %vm518 = vcmp.lt.s32.totalorder %v466, 0
      %vm519 = vcmp.lt.s32.totalorder %v473, 0
      %vm520 = vcmp.lt.s32.totalorder %v480, 0
      %vm521 = vcmp.lt.s32.totalorder %v487, 0
      %vm522 = vcmp.lt.s32.totalorder %v494, 0
      %vm523 = vcmp.lt.s32.totalorder %v501, 0
      %vm524 = vcmp.lt.s32.totalorder %v508, 0
      %vm525 = vmand %vm517, %vm509
      %vm526 = vmand %vm518, %vm510
      %vm527 = vmand %vm519, %vm511
      %vm528 = vmand %vm520, %vm512
      %vm529 = vmand %vm521, %vm513
      %vm530 = vmand %vm522, %vm514
      %vm531 = vmand %vm523, %vm515
      %vm532 = vmand %vm524, %vm516
      %v533 = vadd.s32 %v459, 16
      %v534 = vadd.s32 %v466, 16
      %v535 = vadd.s32 %v473, 16
      %v536 = vadd.s32 %v480, 16
      %v537 = vadd.s32 %v487, 16
      %v538 = vadd.s32 %v494, 16
      %v539 = vadd.s32 %v501, 16
      %v540 = vadd.s32 %v508, 16
      %v541 = vsel %vm525, %v533, %v459
      %v542 = vsel %vm526, %v534, %v466
      %v543 = vsel %vm527, %v535, %v473
      %v544 = vsel %vm528, %v536, %v480
      %v545 = vsel %vm529, %v537, %v487
      %v546 = vsel %vm530, %v538, %v494
      %v547 = vsel %vm531, %v539, %v501
      %v548 = vsel %vm532, %v540, %v508
      %vm549 = vcmask 130048
      %550 = vst.msk [vmem:[#allocation2] sm:$0xff] %vm549, 0.0
      %v551 = vld [vmem:[%s436] sm:$0xff]
      %v552 = vld [vmem:[%s436 + $0x8] sm:$0xff]
      %v553 = vld [vmem:[%s436 + $0x10] sm:$0xff]
      %v554 = vld [vmem:[%s436 + $0x18] sm:$0xff]
      %v555 = vld [vmem:[%s436 + $0x20] sm:$0xff]
      %v556 = vld [vmem:[%s436 + $0x28] sm:$0xff]
      %v557 = vld [vmem:[%s436 + $0x30] sm:$0xff]
      %v558 = vld [vmem:[%s436 + $0x38] sm:$0xff]
      %559 = vst.msk [vmem:[#allocation2 + $0x8] sm:$0xff] %vm549, %v551
      %560 = vst.msk [vmem:[#allocation2 + $0x10] sm:$0xff] %vm549, %v552
      %561 = vst.msk [vmem:[#allocation2 + $0x18] sm:$0xff] %vm549, %v553
      %562 = vst.msk [vmem:[#allocation2 + $0x20] sm:$0xff] %vm549, %v554
      %563 = vst.msk [vmem:[#allocation2 + $0x28] sm:$0xff] %vm549, %v555
      %564 = vst.msk [vmem:[#allocation2 + $0x30] sm:$0xff] %vm549, %v556
      %565 = vst.msk [vmem:[#allocation2 + $0x38] sm:$0xff] %vm549, %v557
      %566 = vst.msk [vmem:[#allocation2 + $0x40] sm:$0xff] %vm549, %v558
      %v567 = vld [vmem:[#allocation2 + $0x6] sm:$0xff]
      %v568 = vld [vmem:[#allocation2 + $0xe] sm:$0xff]
      %v569 = vld [vmem:[#allocation2 + $0x16] sm:$0xff]
      %v570 = vld [vmem:[#allocation2 + $0x1e] sm:$0xff]
      %v571 = vld [vmem:[#allocation2 + $0x26] sm:$0xff]
      %v572 = vld [vmem:[#allocation2 + $0x2e] sm:$0xff]
      %v573 = vld [vmem:[#allocation2 + $0x36] sm:$0xff]
      %v574 = vld [vmem:[#allocation2 + $0x3e] sm:$0xff]
      %vm575 = vcmp.ge.s32.totalorder %v541, 2
      %vm576 = vcmp.ge.s32.totalorder %v542, 2
      %vm577 = vcmp.ge.s32.totalorder %v543, 2
      %vm578 = vcmp.ge.s32.totalorder %v544, 2
      %vm579 = vcmp.ge.s32.totalorder %v545, 2
      %vm580 = vcmp.ge.s32.totalorder %v546, 2
      %vm581 = vcmp.ge.s32.totalorder %v547, 2
      %vm582 = vcmp.ge.s32.totalorder %v548, 2
      %v583 = vsel %vm575, %v567, 0.0
      %v584 = vsel %vm576, %v568, 0.0
      %v585 = vsel %vm577, %v569, 0.0
      %v586 = vsel %vm578, %v570, 0.0
      %v587 = vsel %vm579, %v571, 0.0
      %v588 = vsel %vm580, %v572, 0.0
      %v589 = vsel %vm581, %v573, 0.0
      %v590 = vsel %vm582, %v574, 0.0
      %v591 = vpack.c.bf16 %v584, %v583
      %v592 = vpack.c.bf16 %v586, %v585
      %v593 = vpack.c.bf16 %v588, %v587
      %v594 = vpack.c.bf16 %v590, %v589
      %v595 = vld [vmem:[%s1] sm:$0xf]
      %v596 = vld [vmem:[%s1 + $0x4] sm:$0xf]
      %v597 = vld [vmem:[#allocation2 + $0x7] sm:$0xff]
      %v598 = vld [vmem:[#allocation2 + $0xf] sm:$0xff]
      %v599 = vld [vmem:[#allocation2 + $0x17] sm:$0xff]
      %v600 = vld [vmem:[#allocation2 + $0x1f] sm:$0xff]
      %v601 = vld [vmem:[#allocation2 + $0x27] sm:$0xff]
      %v602 = vld [vmem:[#allocation2 + $0x2f] sm:$0xff]
      %v603 = vld [vmem:[#allocation2 + $0x37] sm:$0xff]
      %v604 = vld [vmem:[#allocation2 + $0x3f] sm:$0xff]
      %vm605 = vcmp.ge.s32.totalorder %v541, 1
      %vm606 = vcmp.ge.s32.totalorder %v542, 1
      %vm607 = vcmp.ge.s32.totalorder %v543, 1
      %vm608 = vcmp.ge.s32.totalorder %v544, 1
      %vm609 = vcmp.ge.s32.totalorder %v545, 1
      %vm610 = vcmp.ge.s32.totalorder %v546, 1
      %vm611 = vcmp.ge.s32.totalorder %v547, 1
      %vm612 = vcmp.ge.s32.totalorder %v548, 1
      %v613 = vsel %vm605, %v597, 0.0
      %v614 = vsel %vm606, %v598, 0.0
      %v615 = vsel %vm607, %v599, 0.0
      %v616 = vsel %vm608, %v600, 0.0
      %v617 = vsel %vm609, %v601, 0.0
      %v618 = vsel %vm610, %v602, 0.0
      %v619 = vsel %vm611, %v603, 0.0
      %v620 = vsel %vm612, %v604, 0.0
      %v621 = vpack.c.bf16 %v614, %v613
      %v622 = vpack.c.bf16 %v616, %v615
      %v623 = vpack.c.bf16 %v618, %v617
      %v624 = vpack.c.bf16 %v620, %v619
      %s625 = scalar_lea.vmem %s1, 8
      %v626 = vld [vmem:[%s625] sm:$0xf]
      %v627 = vld [vmem:[%s625 + $0x4] sm:$0xf]
      %v630 = vunpack.c.l.b16 %v626
      %v631 = vunpack.c.l.b16 %v627
      %v632 = vpack.c.b16 %v631, %v630
      %v635 = vsel %vm549, %v621, 0
      %v638 = vsel %vm549, %v622, 0
      %v641 = vsel %vm549, %v623, 0
      %v644 = vsel %vm549, %v624, 0
      %646 = vmatprep.subr.bf16.mxu0 0
      %647 = vmatpush1.bf16.msra.mxu0 %v632
      %648 = vmatprep.subr.bf16.mxu0 0
      %649 = vmatpush1.bf16.msra.mxu0 0
      %650 = vmatprep.subr.bf16.mxu0 0
      %651 = vmatpush1.bf16.msra.mxu0 0
      %652 = vmatprep.subr.bf16.mxu0 0
      %653 = vmatpush1.bf16.msra.mxu0 0
      %654 = vmatprep.subr.bf16.mxu0 0
      %655 = vmatpush1.bf16.msra.mxu0 0
      %656 = vmatprep.subr.bf16.mxu0 0
      %657 = vmatpush1.bf16.msra.mxu0 0
      %658 = vmatprep.subr.bf16.mxu0 0
      %659 = vmatpush1.bf16.msra.mxu0 0
      %660 = vmatprep.subr.bf16.mxu0 0
      %661 = vmatpush1.bf16.msra.mxu0 0
      %662 = vmatprep.subr.bf16.mxu0 0
      %663 = vmatpush1.bf16.msra.mxu0 0
      %664 = vmatprep.subr.bf16.mxu0 0
      %665 = vmatpush1.bf16.msra.mxu0 0
      %666 = vmatprep.subr.bf16.mxu0 0
      %667 = vmatpush1.bf16.msra.mxu0 0
      %668 = vmatprep.subr.bf16.mxu0 0
      %669 = vmatpush1.bf16.msra.mxu0 0
      %670 = vmatprep.subr.bf16.mxu0 0
      %671 = vmatpush1.bf16.msra.mxu0 0
      %672 = vmatprep.subr.bf16.mxu0 0
      %673 = vmatpush1.bf16.msra.mxu0 0
      %674 = vmatprep.subr.bf16.mxu0 0
      %675 = vmatpush1.bf16.msra.mxu0 0
      %676 = vmatprep.subr.bf16.mxu0 0
      %677 = vmatpush1.bf16.msra.mxu0 0
      %678 = vmatprep.mubr.bf16.mxu0 0
      %679 = vmatmul.mubr.bf16.gmra.mrb[0].mxu0 %v635
      %v680 = vpop.f32.mrb[0].mxu0
      %v681 = vadd.f32 0.0, %v680
      %v682 = vpop.f32.mrb[0].mxu0
      %v683 = vpop.f32.mrb[0].mxu0
      %v684 = vadd.f32 0.0, %v683
      %v685 = vpop.f32.mrb[0].mxu0
      %686 = vmatprep.mubr.bf16.mxu0 0
      %687 = vmatmul.mubr.bf16.gmra.mrb[0].mxu0 %v638
      %v688 = vpop.f32.mrb[0].mxu0
      %v689 = vadd.f32 0.0, %v688
      %v690 = vpop.f32.mrb[0].mxu0
      %v691 = vpop.f32.mrb[0].mxu0
      %v692 = vadd.f32 0.0, %v691
      %v693 = vpop.f32.mrb[0].mxu0
      %694 = vmatprep.mubr.bf16.mxu0 0
      %695 = vmatmul.mubr.bf16.gmra.mrb[0].mxu0 %v641
      %v696 = vpop.f32.mrb[0].mxu0
      %v697 = vadd.f32 0.0, %v696
      %v698 = vpop.f32.mrb[0].mxu0
      %v699 = vpop.f32.mrb[0].mxu0
      %v700 = vadd.f32 0.0, %v699
      %v701 = vpop.f32.mrb[0].mxu0
      %702 = vmatprep.mubr.bf16.mxu0 0
      %703 = vmatmul.mubr.bf16.gmra.mrb[0].mxu0 %v644
      %v704 = vpop.f32.mrb[0].mxu0
      %v705 = vadd.f32 0.0, %v704
      %v706 = vpop.f32.mrb[0].mxu0
      %v707 = vpop.f32.mrb[0].mxu0
      %v708 = vadd.f32 0.0, %v707
      %v709 = vpop.f32.mrb[0].mxu0
      %710 = vdwg.mxu0
      %v713 = vunpack.c.l.b16 %v595
      %v714 = vunpack.c.l.b16 %v596
      %v715 = vpack.c.b16 %v714, %v713
      %v718 = vsel %vm549, %v591, 0
      %v721 = vsel %vm549, %v592, 0
      %v724 = vsel %vm549, %v593, 0
      %v727 = vsel %vm549, %v594, 0
      %729 = vmatprep.subr.bf16.mxu0 0
      %730 = vmatpush1.bf16.msra.mxu0 %v715
      %731 = vmatprep.subr.bf16.mxu0 0
      %732 = vmatpush1.bf16.msra.mxu0 0
      %733 = vmatprep.subr.bf16.mxu0 0
      %734 = vmatpush1.bf16.msra.mxu0 0
      %735 = vmatprep.subr.bf16.mxu0 0
      %736 = vmatpush1.bf16.msra.mxu0 0
      %737 = vmatprep.subr.bf16.mxu0 0
      %738 = vmatpush1.bf16.msra.mxu0 0
      %739 = vmatprep.subr.bf16.mxu0 0
      %740 = vmatpush1.bf16.msra.mxu0 0
      %741 = vmatprep.subr.bf16.mxu0 0
      %742 = vmatpush1.bf16.msra.mxu0 0
      %743 = vmatprep.subr.bf16.mxu0 0
      %744 = vmatpush1.bf16.msra.mxu0 0
      %745 = vmatprep.subr.bf16.mxu0 0
      %746 = vmatpush1.bf16.msra.mxu0 0
      %747 = vmatprep.subr.bf16.mxu0 0
      %748 = vmatpush1.bf16.msra.mxu0 0
      %749 = vmatprep.subr.bf16.mxu0 0
      %750 = vmatpush1.bf16.msra.mxu0 0
      %751 = vmatprep.subr.bf16.mxu0 0
      %752 = vmatpush1.bf16.msra.mxu0 0
      %753 = vmatprep.subr.bf16.mxu0 0
      %754 = vmatpush1.bf16.msra.mxu0 0
      %755 = vmatprep.subr.bf16.mxu0 0
      %756 = vmatpush1.bf16.msra.mxu0 0
      %757 = vmatprep.subr.bf16.mxu0 0
      %758 = vmatpush1.bf16.msra.mxu0 0
      %759 = vmatprep.subr.bf16.mxu0 0
      %760 = vmatpush1.bf16.msra.mxu0 0
      %761 = vmatprep.mubr.bf16.mxu0 0
      %762 = vmatmul.mubr.bf16.gmra.mrb[0].mxu0 %v718
      %v763 = vpop.f32.mrb[0].mxu0
      %v764 = vadd.f32 %v681, %v763
      %v765 = vpop.f32.mrb[0].mxu0
      %v766 = vpop.f32.mrb[0].mxu0
      %v767 = vadd.f32 %v684, %v766
      %v768 = vpop.f32.mrb[0].mxu0
      %769 = vmatprep.mubr.bf16.mxu0 0
      %770 = vmatmul.mubr.bf16.gmra.mrb[0].mxu0 %v721
      %v771 = vpop.f32.mrb[0].mxu0
      %v772 = vadd.f32 %v689, %v771
      %v773 = vpop.f32.mrb[0].mxu0
      %v774 = vpop.f32.mrb[0].mxu0
      %v775 = vadd.f32 %v692, %v774
      %v776 = vpop.f32.mrb[0].mxu0
      %777 = vmatprep.mubr.bf16.mxu0 0
      %778 = vmatmul.mubr.bf16.gmra.mrb[0].mxu0 %v724
      %v779 = vpop.f32.mrb[0].mxu0
      %v780 = vadd.f32 %v697, %v779
      %v781 = vpop.f32.mrb[0].mxu0
      %v782 = vpop.f32.mrb[0].mxu0
      %v783 = vadd.f32 %v700, %v782
      %v784 = vpop.f32.mrb[0].mxu0
      %785 = vmatprep.mubr.bf16.mxu0 0
      %786 = vmatmul.mubr.bf16.gmra.mrb[0].mxu0 %v727
      %v787 = vpop.f32.mrb[0].mxu0
      %v788 = vadd.f32 %v705, %v787
      %v789 = vpop.f32.mrb[0].mxu0
      %v790 = vpop.f32.mrb[0].mxu0
      %v791 = vadd.f32 %v708, %v790
      %v792 = vpop.f32.mrb[0].mxu0
      %793 = vdwg.mxu0
      %v794 = vpack.c.bf16 %v552, %v551
      %v795 = vpack.c.bf16 %v554, %v553
      %v796 = vpack.c.bf16 %v556, %v555
      %v797 = vpack.c.bf16 %v558, %v557
      %s798 = scalar_lea.vmem %s1, 16
      %v799 = vld [vmem:[%s798] sm:$0xf]
      %v800 = vld [vmem:[%s798 + $0x4] sm:$0xf]
      %v803 = vunpack.c.l.b16 %v799
      %v804 = vunpack.c.l.b16 %v800
      %v805 = vpack.c.b16 %v804, %v803
      %v808 = vsel %vm549, %v794, 0
      %v811 = vsel %vm549, %v795, 0
      %v814 = vsel %vm549, %v796, 0
      %v817 = vsel %vm549, %v797, 0
      %819 = vmatprep.subr.bf16.mxu0 0
      %820 = vmatpush1.bf16.msra.mxu0 %v805
      %821 = vmatprep.subr.bf16.mxu0 0
      %822 = vmatpush1.bf16.msra.mxu0 0
      %823 = vmatprep.subr.bf16.mxu0 0
      %824 = vmatpush1.bf16.msra.mxu0 0
      %825 = vmatprep.subr.bf16.mxu0 0
      %826 = vmatpush1.bf16.msra.mxu0 0
      %827 = vmatprep.subr.bf16.mxu0 0
      %828 = vmatpush1.bf16.msra.mxu0 0
      %829 = vmatprep.subr.bf16.mxu0 0
      %830 = vmatpush1.bf16.msra.mxu0 0
      %831 = vmatprep.subr.bf16.mxu0 0
      %832 = vmatpush1.bf16.msra.mxu0 0
      %833 = vmatprep.subr.bf16.mxu0 0
      %834 = vmatpush1.bf16.msra.mxu0 0
      %835 = vmatprep.subr.bf16.mxu0 0
      %836 = vmatpush1.bf16.msra.mxu0 0
      %837 = vmatprep.subr.bf16.mxu0 0
      %838 = vmatpush1.bf16.msra.mxu0 0
      %839 = vmatprep.subr.bf16.mxu0 0
      %840 = vmatpush1.bf16.msra.mxu0 0
      %841 = vmatprep.subr.bf16.mxu0 0
      %842 = vmatpush1.bf16.msra.mxu0 0
      %843 = vmatprep.subr.bf16.mxu0 0
      %844 = vmatpush1.bf16.msra.mxu0 0
      %845 = vmatprep.subr.bf16.mxu0 0
      %846 = vmatpush1.bf16.msra.mxu0 0
      %847 = vmatprep.subr.bf16.mxu0 0
      %848 = vmatpush1.bf16.msra.mxu0 0
      %849 = vmatprep.subr.bf16.mxu0 0
      %850 = vmatpush1.bf16.msra.mxu0 0
      %851 = vmatprep.mubr.bf16.mxu0 0
      %852 = vmatmul.mubr.bf16.gmra.mrb[0].mxu0 %v808
      %v853 = vpop.f32.mrb[0].mxu0
      %v854 = vadd.f32 0.0, %v853
      %v855 = vpop.f32.mrb[0].mxu0
      %v856 = vpop.f32.mrb[0].mxu0
      %v857 = vadd.f32 0.0, %v856
      %v858 = vpop.f32.mrb[0].mxu0
      %859 = vmatprep.mubr.bf16.mxu0 0
      %860 = vmatmul.mubr.bf16.gmra.mrb[0].mxu0 %v811
      %v861 = vpop.f32.mrb[0].mxu0
      %v862 = vadd.f32 0.0, %v861
      %v863 = vpop.f32.mrb[0].mxu0
      %v864 = vpop.f32.mrb[0].mxu0
      %v865 = vadd.f32 0.0, %v864
      %v866 = vpop.f32.mrb[0].mxu0
      %867 = vmatprep.mubr.bf16.mxu0 0
      %868 = vmatmul.mubr.bf16.gmra.mrb[0].mxu0 %v814
      %v869 = vpop.f32.mrb[0].mxu0
      %v870 = vadd.f32 0.0, %v869
      %v871 = vpop.f32.mrb[0].mxu0
      %v872 = vpop.f32.mrb[0].mxu0
      %v873 = vadd.f32 0.0, %v872
      %v874 = vpop.f32.mrb[0].mxu0
      %875 = vmatprep.mubr.bf16.mxu0 0
      %876 = vmatmul.mubr.bf16.gmra.mrb[0].mxu0 %v817
      %v877 = vpop.f32.mrb[0].mxu0
      %v878 = vadd.f32 0.0, %v877
      %v879 = vpop.f32.mrb[0].mxu0
      %v880 = vpop.f32.mrb[0].mxu0
      %v881 = vadd.f32 0.0, %v880
      %v882 = vpop.f32.mrb[0].mxu0
      %883 = vdwg.mxu0
      %v884 = vadd.f32 %v764, %v854
      %v885 = vadd.f32 %v767, %v857
      %v886 = vadd.f32 %v772, %v862
      %v887 = vadd.f32 %v775, %v865
      %v888 = vadd.f32 %v780, %v870
      %v889 = vadd.f32 %v783, %v873
      %v890 = vadd.f32 %v788, %v878
      %v891 = vadd.f32 %v791, %v881
      %v892 = vld [vmem:[%s2] sm:$0x1]
      %v894 = vlaneseq
      %v895 = vshrl.u32 %v894, 7
      %v896 = vsub.s32 0, %v895
      %v897 = vrot.slane %v892, %v896
      %v899 = vadd.f32 %v884, %v897
      %v900 = vadd.f32 %v885, %v897
      %v901 = vadd.f32 %v886, %v897
      %v902 = vadd.f32 %v887, %v897
      %v903 = vadd.f32 %v888, %v897
      %v904 = vadd.f32 %v889, %v897
      %v905 = vadd.f32 %v890, %v897
      %v906 = vadd.f32 %v891, %v897
      %v907 = vmax.f32 %v899, 0.0
      %v908 = vmax.f32 %v900, 0.0
      %v909 = vmax.f32 %v901, 0.0
      %v910 = vmax.f32 %v902, 0.0
      %v911 = vmax.f32 %v903, 0.0
      %v912 = vmax.f32 %v904, 0.0
      %v913 = vmax.f32 %v905, 0.0
      %v914 = vmax.f32 %v906, 0.0
      %915 = vst.msk [vmem:[#allocation2 + $0x8] sm:$0xff] %vm549, %v907
      %916 = vst.msk [vmem:[#allocation2 + $0x10] sm:$0xff] %vm549, %v908
      %917 = vst.msk [vmem:[#allocation2 + $0x18] sm:$0xff] %vm549, %v909
      %918 = vst.msk [vmem:[#allocation2 + $0x20] sm:$0xff] %vm549, %v910
      %919 = vst.msk [vmem:[#allocation2 + $0x28] sm:$0xff] %vm549, %v911
      %920 = vst.msk [vmem:[#allocation2 + $0x30] sm:$0xff] %vm549, %v912
      %921 = vst.msk [vmem:[#allocation2 + $0x38] sm:$0xff] %vm549, %v913
      %922 = vst.msk [vmem:[#allocation2 + $0x40] sm:$0xff] %vm549, %v914
      %v923 = vld [vmem:[#allocation2 + $0x6] sm:$0xff]
      %v924 = vld [vmem:[#allocation2 + $0xe] sm:$0xff]
      %v925 = vld [vmem:[#allocation2 + $0x16] sm:$0xff]
      %v926 = vld [vmem:[#allocation2 + $0x1e] sm:$0xff]
      %v927 = vld [vmem:[#allocation2 + $0x26] sm:$0xff]
      %v928 = vld [vmem:[#allocation2 + $0x2e] sm:$0xff]
      %v929 = vld [vmem:[#allocation2 + $0x36] sm:$0xff]
      %v930 = vld [vmem:[#allocation2 + $0x3e] sm:$0xff]
      %v931 = vsel %vm575, %v923, 0.0
      %v932 = vsel %vm576, %v924, 0.0
      %v933 = vsel %vm577, %v925, 0.0
      %v934 = vsel %vm578, %v926, 0.0
      %v935 = vsel %vm579, %v927, 0.0
      %v936 = vsel %vm580, %v928, 0.0
      %v937 = vsel %vm581, %v929, 0.0
      %v938 = vsel %vm582, %v930, 0.0
      %v939 = vpack.c.bf16 %v932, %v931
      %v940 = vpack.c.bf16 %v934, %v933
      %v941 = vpack.c.bf16 %v936, %v935
      %v942 = vpack.c.bf16 %v938, %v937
      %v943 = vld [vmem:[%s3] sm:$0xf]
      %v944 = vld [vmem:[%s3 + $0x4] sm:$0xf]
      %v945 = vld [vmem:[#allocation2 + $0x7] sm:$0xff]
      %v946 = vld [vmem:[#allocation2 + $0xf] sm:$0xff]
      %v947 = vld [vmem:[#allocation2 + $0x17] sm:$0xff]
      %v948 = vld [vmem:[#allocation2 + $0x1f] sm:$0xff]
      %v949 = vld [vmem:[#allocation2 + $0x27] sm:$0xff]
      %v950 = vld [vmem:[#allocation2 + $0x2f] sm:$0xff]
      %v951 = vld [vmem:[#allocation2 + $0x37] sm:$0xff]
      %v952 = vld [vmem:[#allocation2 + $0x3f] sm:$0xff]
      %v953 = vsel %vm605, %v945, 0.0
      %v954 = vsel %vm606, %v946, 0.0
      %v955 = vsel %vm607, %v947, 0.0
      %v956 = vsel %vm608, %v948, 0.0
      %v957 = vsel %vm609, %v949, 0.0
      %v958 = vsel %vm610, %v950, 0.0
      %v959 = vsel %vm611, %v951, 0.0
      %v960 = vsel %vm612, %v952, 0.0
      %v961 = vpack.c.bf16 %v954, %v953
      %v962 = vpack.c.bf16 %v956, %v955
      %v963 = vpack.c.bf16 %v958, %v957
      %v964 = vpack.c.bf16 %v960, %v959
      %s965 = scalar_lea.vmem %s3, 8
      %v966 = vld [vmem:[%s965] sm:$0xf]
      %v967 = vld [vmem:[%s965 + $0x4] sm:$0xf]
      %v970 = vunpack.c.l.b16 %v966
      %v971 = vunpack.c.l.b16 %v967
      %v972 = vpack.c.b16 %v971, %v970
      %v975 = vsel %vm549, %v961, 0
      %v978 = vsel %vm549, %v962, 0
      %v981 = vsel %vm549, %v963, 0
      %v984 = vsel %vm549, %v964, 0
      %986 = vmatprep.subr.bf16.mxu0 0
      %987 = vmatpush1.bf16.msra.mxu0 %v972
      %988 = vmatprep.subr.bf16.mxu0 0
      %989 = vmatpush1.bf16.msra.mxu0 0
      %990 = vmatprep.subr.bf16.mxu0 0
      %991 = vmatpush1.bf16.msra.mxu0 0
      %992 = vmatprep.subr.bf16.mxu0 0
      %993 = vmatpush1.bf16.msra.mxu0 0
      %994 = vmatprep.subr.bf16.mxu0 0
      %995 = vmatpush1.bf16.msra.mxu0 0
      %996 = vmatprep.subr.bf16.mxu0 0
      %997 = vmatpush1.bf16.msra.mxu0 0
      %998 = vmatprep.subr.bf16.mxu0 0
      %999 = vmatpush1.bf16.msra.mxu0 0
      %1000 = vmatprep.subr.bf16.mxu0 0
      %1001 = vmatpush1.bf16.msra.mxu0 0
      %1002 = vmatprep.subr.bf16.mxu0 0
      %1003 = vmatpush1.bf16.msra.mxu0 0
      %1004 = vmatprep.subr.bf16.mxu0 0
      %1005 = vmatpush1.bf16.msra.mxu0 0
      %1006 = vmatprep.subr.bf16.mxu0 0
      %1007 = vmatpush1.bf16.msra.mxu0 0
      %1008 = vmatprep.subr.bf16.mxu0 0
      %1009 = vmatpush1.bf16.msra.mxu0 0
      %1010 = vmatprep.subr.bf16.mxu0 0
      %1011 = vmatpush1.bf16.msra.mxu0 0
      %1012 = vmatprep.subr.bf16.mxu0 0
      %1013 = vmatpush1.bf16.msra.mxu0 0
      %1014 = vmatprep.subr.bf16.mxu0 0
      %1015 = vmatpush1.bf16.msra.mxu0 0
      %1016 = vmatprep.subr.bf16.mxu0 0
      %1017 = vmatpush1.bf16.msra.mxu0 0
      %1018 = vmatprep.mubr.bf16.mxu0 0
      %1019 = vmatmul.mubr.bf16.gmra.mrb[0].mxu0 %v975
      %v1020 = vpop.f32.mrb[0].mxu0
      %v1021 = vadd.f32 0.0, %v1020
      %v1022 = vpop.f32.mrb[0].mxu0
      %v1023 = vpop.f32.mrb[0].mxu0
      %v1024 = vadd.f32 0.0, %v1023
      %v1025 = vpop.f32.mrb[0].mxu0
      %1026 = vmatprep.mubr.bf16.mxu0 0
      %1027 = vmatmul.mubr.bf16.gmra.mrb[0].mxu0 %v978
      %v1028 = vpop.f32.mrb[0].mxu0
      %v1029 = vadd.f32 0.0, %v1028
      %v1030 = vpop.f32.mrb[0].mxu0
      %v1031 = vpop.f32.mrb[0].mxu0
      %v1032 = vadd.f32 0.0, %v1031
      %v1033 = vpop.f32.mrb[0].mxu0
      %1034 = vmatprep.mubr.bf16.mxu0 0
      %1035 = vmatmul.mubr.bf16.gmra.mrb[0].mxu0 %v981
      %v1036 = vpop.f32.mrb[0].mxu0
      %v1037 = vadd.f32 0.0, %v1036
      %v1038 = vpop.f32.mrb[0].mxu0
      %v1039 = vpop.f32.mrb[0].mxu0
      %v1040 = vadd.f32 0.0, %v1039
      %v1041 = vpop.f32.mrb[0].mxu0
      %1042 = vmatprep.mubr.bf16.mxu0 0
      %1043 = vmatmul.mubr.bf16.gmra.mrb[0].mxu0 %v984
      %v1044 = vpop.f32.mrb[0].mxu0
      %v1045 = vadd.f32 0.0, %v1044
      %v1046 = vpop.f32.mrb[0].mxu0
      %v1047 = vpop.f32.mrb[0].mxu0
      %v1048 = vadd.f32 0.0, %v1047
      %v1049 = vpop.f32.mrb[0].mxu0
      %1050 = vdwg.mxu0
      %v1053 = vunpack.c.l.b16 %v943
      %v1054 = vunpack.c.l.b16 %v944
      %v1055 = vpack.c.b16 %v1054, %v1053
      %v1058 = vsel %vm549, %v939, 0
      %v1061 = vsel %vm549, %v940, 0
      %v1064 = vsel %vm549, %v941, 0
      %v1067 = vsel %vm549, %v942, 0
      %1069 = vmatprep.subr.bf16.mxu0 0
      %1070 = vmatpush1.bf16.msra.mxu0 %v1055
      %1071 = vmatprep.subr.bf16.mxu0 0
      %1072 = vmatpush1.bf16.msra.mxu0 0
      %1073 = vmatprep.subr.bf16.mxu0 0
      %1074 = vmatpush1.bf16.msra.mxu0 0
      %1075 = vmatprep.subr.bf16.mxu0 0
      %1076 = vmatpush1.bf16.msra.mxu0 0
      %1077 = vmatprep.subr.bf16.mxu0 0
      %1078 = vmatpush1.bf16.msra.mxu0 0
      %1079 = vmatprep.subr.bf16.mxu0 0
      %1080 = vmatpush1.bf16.msra.mxu0 0
      %1081 = vmatprep.subr.bf16.mxu0 0
      %1082 = vmatpush1.bf16.msra.mxu0 0
      %1083 = vmatprep.subr.bf16.mxu0 0
      %1084 = vmatpush1.bf16.msra.mxu0 0
      %1085 = vmatprep.subr.bf16.mxu0 0
      %1086 = vmatpush1.bf16.msra.mxu0 0
      %1087 = vmatprep.subr.bf16.mxu0 0
      %1088 = vmatpush1.bf16.msra.mxu0 0
      %1089 = vmatprep.subr.bf16.mxu0 0
      %1090 = vmatpush1.bf16.msra.mxu0 0
      %1091 = vmatprep.subr.bf16.mxu0 0
      %1092 = vmatpush1.bf16.msra.mxu0 0
      %1093 = vmatprep.subr.bf16.mxu0 0
      %1094 = vmatpush1.bf16.msra.mxu0 0
      %1095 = vmatprep.subr.bf16.mxu0 0
      %1096 = vmatpush1.bf16.msra.mxu0 0
      %1097 = vmatprep.subr.bf16.mxu0 0
      %1098 = vmatpush1.bf16.msra.mxu0 0
      %1099 = vmatprep.subr.bf16.mxu0 0
      %1100 = vmatpush1.bf16.msra.mxu0 0
      %1101 = vmatprep.mubr.bf16.mxu0 0
      %1102 = vmatmul.mubr.bf16.gmra.mrb[0].mxu0 %v1058
      %v1103 = vpop.f32.mrb[0].mxu0
      %v1104 = vadd.f32 %v1021, %v1103
      %v1105 = vpop.f32.mrb[0].mxu0
      %v1106 = vpop.f32.mrb[0].mxu0
      %v1107 = vadd.f32 %v1024, %v1106
      %v1108 = vpop.f32.mrb[0].mxu0
      %1109 = vmatprep.mubr.bf16.mxu0 0
      %1110 = vmatmul.mubr.bf16.gmra.mrb[0].mxu0 %v1061
      %v1111 = vpop.f32.mrb[0].mxu0
      %v1112 = vadd.f32 %v1029, %v1111
      %v1113 = vpop.f32.mrb[0].mxu0
      %v1114 = vpop.f32.mrb[0].mxu0
      %v1115 = vadd.f32 %v1032, %v1114
      %v1116 = vpop.f32.mrb[0].mxu0
      %1117 = vmatprep.mubr.bf16.mxu0 0
      %1118 = vmatmul.mubr.bf16.gmra.mrb[0].mxu0 %v1064
      %v1119 = vpop.f32.mrb[0].mxu0
      %v1120 = vadd.f32 %v1037, %v1119
      %v1121 = vpop.f32.mrb[0].mxu0
      %v1122 = vpop.f32.mrb[0].mxu0
      %v1123 = vadd.f32 %v1040, %v1122
      %v1124 = vpop.f32.mrb[0].mxu0
      %1125 = vmatprep.mubr.bf16.mxu0 0
      %1126 = vmatmul.mubr.bf16.gmra.mrb[0].mxu0 %v1067
      %v1127 = vpop.f32.mrb[0].mxu0
      %v1128 = vadd.f32 %v1045, %v1127
      %v1129 = vpop.f32.mrb[0].mxu0
      %v1130 = vpop.f32.mrb[0].mxu0
      %v1131 = vadd.f32 %v1048, %v1130
      %v1132 = vpop.f32.mrb[0].mxu0
      %1133 = vdwg.mxu0
      %v1134 = vpack.c.bf16 %v908, %v907
      %v1135 = vpack.c.bf16 %v910, %v909
      %v1136 = vpack.c.bf16 %v912, %v911
      %v1137 = vpack.c.bf16 %v914, %v913
      %s1138 = scalar_lea.vmem %s3, 16
      %v1139 = vld [vmem:[%s1138] sm:$0xf]
      %v1140 = vld [vmem:[%s1138 + $0x4] sm:$0xf]
      %v1143 = vunpack.c.l.b16 %v1139
      %v1144 = vunpack.c.l.b16 %v1140
      %v1145 = vpack.c.b16 %v1144, %v1143
      %v1148 = vsel %vm549, %v1134, 0
      %v1151 = vsel %vm549, %v1135, 0
      %v1154 = vsel %vm549, %v1136, 0
      %v1157 = vsel %vm549, %v1137, 0
      %1159 = vmatprep.subr.bf16.mxu0 0
      %1160 = vmatpush1.bf16.msra.mxu0 %v1145
      %1161 = vmatprep.subr.bf16.mxu0 0
      %1162 = vmatpush1.bf16.msra.mxu0 0
      %1163 = vmatprep.subr.bf16.mxu0 0
      %1164 = vmatpush1.bf16.msra.mxu0 0
      %1165 = vmatprep.subr.bf16.mxu0 0
      %1166 = vmatpush1.bf16.msra.mxu0 0
      %1167 = vmatprep.subr.bf16.mxu0 0
      %1168 = vmatpush1.bf16.msra.mxu0 0
      %1169 = vmatprep.subr.bf16.mxu0 0
      %1170 = vmatpush1.bf16.msra.mxu0 0
      %1171 = vmatprep.subr.bf16.mxu0 0
      %1172 = vmatpush1.bf16.msra.mxu0 0
      %1173 = vmatprep.subr.bf16.mxu0 0
      %1174 = vmatpush1.bf16.msra.mxu0 0
      %1175 = vmatprep.subr.bf16.mxu0 0
      %1176 = vmatpush1.bf16.msra.mxu0 0
      %1177 = vmatprep.subr.bf16.mxu0 0
      %1178 = vmatpush1.bf16.msra.mxu0 0
      %1179 = vmatprep.subr.bf16.mxu0 0
      %1180 = vmatpush1.bf16.msra.mxu0 0
      %1181 = vmatprep.subr.bf16.mxu0 0
      %1182 = vmatpush1.bf16.msra.mxu0 0
      %1183 = vmatprep.subr.bf16.mxu0 0
      %1184 = vmatpush1.bf16.msra.mxu0 0
      %1185 = vmatprep.subr.bf16.mxu0 0
      %1186 = vmatpush1.bf16.msra.mxu0 0
      %1187 = vmatprep.subr.bf16.mxu0 0
      %1188 = vmatpush1.bf16.msra.mxu0 0
      %1189 = vmatprep.subr.bf16.mxu0 0
      %1190 = vmatpush1.bf16.msra.mxu0 0
      %1191 = vmatprep.mubr.bf16.mxu0 0
      %1192 = vmatmul.mubr.bf16.gmra.mrb[0].mxu0 %v1148
      %v1193 = vpop.f32.mrb[0].mxu0
      %v1194 = vadd.f32 0.0, %v1193
      %v1195 = vpop.f32.mrb[0].mxu0
      %v1196 = vpop.f32.mrb[0].mxu0
      %v1197 = vadd.f32 0.0, %v1196
      %v1198 = vpop.f32.mrb[0].mxu0
      %1199 = vmatprep.mubr.bf16.mxu0 0
      %1200 = vmatmul.mubr.bf16.gmra.mrb[0].mxu0 %v1151
      %v1201 = vpop.f32.mrb[0].mxu0
      %v1202 = vadd.f32 0.0, %v1201
      %v1203 = vpop.f32.mrb[0].mxu0
      %v1204 = vpop.f32.mrb[0].mxu0
      %v1205 = vadd.f32 0.0, %v1204
      %v1206 = vpop.f32.mrb[0].mxu0
      %1207 = vmatprep.mubr.bf16.mxu0 0
      %1208 = vmatmul.mubr.bf16.gmra.mrb[0].mxu0 %v1154
      %v1209 = vpop.f32.mrb[0].mxu0
      %v1210 = vadd.f32 0.0, %v1209
      %v1211 = vpop.f32.mrb[0].mxu0
      %v1212 = vpop.f32.mrb[0].mxu0
      %v1213 = vadd.f32 0.0, %v1212
      %v1214 = vpop.f32.mrb[0].mxu0
      %1215 = vmatprep.mubr.bf16.mxu0 0
      %1216 = vmatmul.mubr.bf16.gmra.mrb[0].mxu0 %v1157
      %v1217 = vpop.f32.mrb[0].mxu0
      %v1218 = vadd.f32 0.0, %v1217
      %v1219 = vpop.f32.mrb[0].mxu0
      %v1220 = vpop.f32.mrb[0].mxu0
      %v1221 = vadd.f32 0.0, %v1220
      %v1222 = vpop.f32.mrb[0].mxu0
      %1223 = vdwg.mxu0
      %v1224 = vadd.f32 %v1104, %v1194
      %v1225 = vadd.f32 %v1107, %v1197
      %v1226 = vadd.f32 %v1112, %v1202
      %v1227 = vadd.f32 %v1115, %v1205
      %v1228 = vadd.f32 %v1120, %v1210
      %v1229 = vadd.f32 %v1123, %v1213
      %v1230 = vadd.f32 %v1128, %v1218
      %v1231 = vadd.f32 %v1131, %v1221
      %v1232 = vld [vmem:[%s4] sm:$0x1]
      %v1234 = vlaneseq
      %v1235 = vshrl.u32 %v1234, 7
      %v1236 = vsub.s32 0, %v1235
      %v1237 = vrot.slane %v1232, %v1236
      %v1239 = vadd.f32 %v1224, %v1237
      %v1240 = vadd.f32 %v1225, %v1237
      %v1241 = vadd.f32 %v1226, %v1237
      %v1242 = vadd.f32 %v1227, %v1237
      %v1243 = vadd.f32 %v1228, %v1237
      %v1244 = vadd.f32 %v1229, %v1237
      %v1245 = vadd.f32 %v1230, %v1237
      %v1246 = vadd.f32 %v1231, %v1237
      %v1247 = vmax.f32 %v1239, 0.0
      %v1248 = vmax.f32 %v1240, 0.0
      %v1249 = vmax.f32 %v1241, 0.0
      %v1250 = vmax.f32 %v1242, 0.0
      %v1251 = vmax.f32 %v1243, 0.0
      %v1252 = vmax.f32 %v1244, 0.0
      %v1253 = vmax.f32 %v1245, 0.0
      %v1254 = vmax.f32 %v1246, 0.0
      %v1255 = vld [vmem:[%s5] sm:$0xf]
      %v1256 = vld [vmem:[%s5 + $0x4] sm:$0xf]
      %v1257 = vld [vmem:[%s6] sm:$0x1]
      %v1259 = vlaneseq
      %v1260 = vshrl.u32 %v1259, 7
      %v1261 = vsub.s32 0, %v1260
      %v1262 = vrot.slane %v1257, %v1261
      %v1266 = vunpack.c.l.b16 %v1255
      %v1267 = vunpack.c.l.b16 %v1256
      %v1268 = vpack.c.b16 %v1267, %v1266
      %1270 = vmatprep.subr.bf16.mxu0 0
      %1271 = vmatpush1.bf16.msra.mxu0 %v1268
      %1272 = vmatprep.subr.bf16.mxu0 0
      %1273 = vmatpush1.bf16.msra.mxu0 0
      %1274 = vmatprep.subr.bf16.mxu0 0
      %1275 = vmatpush1.bf16.msra.mxu0 0
      %1276 = vmatprep.subr.bf16.mxu0 0
      %1277 = vmatpush1.bf16.msra.mxu0 0
      %1278 = vmatprep.subr.bf16.mxu0 0
      %1279 = vmatpush1.bf16.msra.mxu0 0
      %1280 = vmatprep.subr.bf16.mxu0 0
      %1281 = vmatpush1.bf16.msra.mxu0 0
      %1282 = vmatprep.subr.bf16.mxu0 0
      %1283 = vmatpush1.bf16.msra.mxu0 0
      %1284 = vmatprep.subr.bf16.mxu0 0
      %1285 = vmatpush1.bf16.msra.mxu0 0
      %1286 = vmatprep.subr.bf16.mxu0 0
      %1287 = vmatpush1.bf16.msra.mxu0 0
      %1288 = vmatprep.subr.bf16.mxu0 0
      %1289 = vmatpush1.bf16.msra.mxu0 0
      %1290 = vmatprep.subr.bf16.mxu0 0
      %1291 = vmatpush1.bf16.msra.mxu0 0
      %1292 = vmatprep.subr.bf16.mxu0 0
      %1293 = vmatpush1.bf16.msra.mxu0 0
      %1294 = vmatprep.subr.bf16.mxu0 0
      %1295 = vmatpush1.bf16.msra.mxu0 0
      %1296 = vmatprep.subr.bf16.mxu0 0
      %1297 = vmatpush1.bf16.msra.mxu0 0
      %1298 = vmatprep.subr.bf16.mxu0 0
      %1299 = vmatpush1.bf16.msra.mxu0 0
      %1300 = vmatprep.subr.bf16.mxu0 0
      %1301 = vmatpush1.bf16.msra.mxu0 0
      %1302 = vmatprep.mubr.bf16.mxu0 0
      %1303 = vmatmul.mubr.bf16.gmra.mrb[0].mxu0 %v808
      %v1304 = vpop.f32.mrb[0].mxu0
      %v1305 = vadd.f32 %v1262, %v1304
      %v1306 = vpop.f32.mrb[0].mxu0
      %v1307 = vpop.f32.mrb[0].mxu0
      %v1308 = vadd.f32 %v1262, %v1307
      %v1309 = vpop.f32.mrb[0].mxu0
      %1310 = vmatprep.mubr.bf16.mxu0 0
      %1311 = vmatmul.mubr.bf16.gmra.mrb[0].mxu0 %v811
      %v1312 = vpop.f32.mrb[0].mxu0
      %v1313 = vadd.f32 %v1262, %v1312
      %v1314 = vpop.f32.mrb[0].mxu0
      %v1315 = vpop.f32.mrb[0].mxu0
      %v1316 = vadd.f32 %v1262, %v1315
      %v1317 = vpop.f32.mrb[0].mxu0
      %1318 = vmatprep.mubr.bf16.mxu0 0
      %1319 = vmatmul.mubr.bf16.gmra.mrb[0].mxu0 %v814
      %v1320 = vpop.f32.mrb[0].mxu0
      %v1321 = vadd.f32 %v1262, %v1320
      %v1322 = vpop.f32.mrb[0].mxu0
      %v1323 = vpop.f32.mrb[0].mxu0
      %v1324 = vadd.f32 %v1262, %v1323
      %v1325 = vpop.f32.mrb[0].mxu0
      %1326 = vmatprep.mubr.bf16.mxu0 0
      %1327 = vmatmul.mubr.bf16.gmra.mrb[0].mxu0 %v817
      %v1328 = vpop.f32.mrb[0].mxu0
      %v1329 = vadd.f32 %v1262, %v1328
      %v1330 = vpop.f32.mrb[0].mxu0
      %v1331 = vpop.f32.mrb[0].mxu0
      %v1332 = vadd.f32 %v1262, %v1331
      %v1333 = vpop.f32.mrb[0].mxu0
      %1334 = vdwg.mxu0
      %v1335 = vadd.f32 %v1247, %v1305
      %v1336 = vadd.f32 %v1248, %v1308
      %v1337 = vadd.f32 %v1249, %v1313
      %v1338 = vadd.f32 %v1250, %v1316
      %v1339 = vadd.f32 %v1251, %v1321
      %v1340 = vadd.f32 %v1252, %v1324
      %v1341 = vadd.f32 %v1253, %v1329
      %v1342 = vadd.f32 %v1254, %v1332
      %v1343 = vmax.f32 %v1335, 0.0
      %v1344 = vmax.f32 %v1336, 0.0
      %v1345 = vmax.f32 %v1337, 0.0
      %v1346 = vmax.f32 %v1338, 0.0
      %v1347 = vmax.f32 %v1339, 0.0
      %v1348 = vmax.f32 %v1340, 0.0
      %v1349 = vmax.f32 %v1341, 0.0
      %v1350 = vmax.f32 %v1342, 0.0
      %1351 = vst.msk [vmem:[#allocation2 + $0x8] sm:$0xff] %vm549, %v1343
      %1352 = vst.msk [vmem:[#allocation2 + $0x10] sm:$0xff] %vm549, %v1344
      %1353 = vst.msk [vmem:[#allocation2 + $0x18] sm:$0xff] %vm549, %v1345
      %1354 = vst.msk [vmem:[#allocation2 + $0x20] sm:$0xff] %vm549, %v1346
      %1355 = vst.msk [vmem:[#allocation2 + $0x28] sm:$0xff] %vm549, %v1347
      %1356 = vst.msk [vmem:[#allocation2 + $0x30] sm:$0xff] %vm549, %v1348
      %1357 = vst.msk [vmem:[#allocation2 + $0x38] sm:$0xff] %vm549, %v1349
      %1358 = vst.msk [vmem:[#allocation2 + $0x40] sm:$0xff] %vm549, %v1350
      %v1359 = vld [vmem:[#allocation2 + $0x4] sm:$0xff]
      %v1360 = vld [vmem:[#allocation2 + $0xc] sm:$0xff]
      %v1361 = vld [vmem:[#allocation2 + $0x14] sm:$0xff]
      %v1362 = vld [vmem:[#allocation2 + $0x1c] sm:$0xff]
      %v1363 = vld [vmem:[#allocation2 + $0x24] sm:$0xff]
      %v1364 = vld [vmem:[#allocation2 + $0x2c] sm:$0xff]
      %v1365 = vld [vmem:[#allocation2 + $0x34] sm:$0xff]
      %v1366 = vld [vmem:[#allocation2 + $0x3c] sm:$0xff]
      %vm1367 = vcmp.ge.s32.totalorder %v541, 4
      %vm1368 = vcmp.ge.s32.totalorder %v542, 4
      %vm1369 = vcmp.ge.s32.totalorder %v543, 4
      %vm1370 = vcmp.ge.s32.totalorder %v544, 4
      %vm1371 = vcmp.ge.s32.totalorder %v545, 4
      %vm1372 = vcmp.ge.s32.totalorder %v546, 4
      %vm1373 = vcmp.ge.s32.totalorder %v547, 4
      %vm1374 = vcmp.ge.s32.totalorder %v548, 4
      %v1375 = vsel %vm1367, %v1359, 0.0
      %v1376 = vsel %vm1368, %v1360, 0.0
      %v1377 = vsel %vm1369, %v1361, 0.0
      %v1378 = vsel %vm1370, %v1362, 0.0
      %v1379 = vsel %vm1371, %v1363, 0.0
      %v1380 = vsel %vm1372, %v1364, 0.0
      %v1381 = vsel %vm1373, %v1365, 0.0
      %v1382 = vsel %vm1374, %v1366, 0.0
      %v1383 = vpack.c.bf16 %v1376, %v1375
      %v1384 = vpack.c.bf16 %v1378, %v1377
      %v1385 = vpack.c.bf16 %v1380, %v1379
      %v1386 = vpack.c.bf16 %v1382, %v1381
      %v1387 = vld [vmem:[%s7] sm:$0xf]
      %v1388 = vld [vmem:[%s7 + $0x4] sm:$0xf]
      %v1389 = vld [vmem:[#allocation2 + $0x6] sm:$0xff]
      %v1390 = vld [vmem:[#allocation2 + $0xe] sm:$0xff]
      %v1391 = vld [vmem:[#allocation2 + $0x16] sm:$0xff]
      %v1392 = vld [vmem:[#allocation2 + $0x1e] sm:$0xff]
      %v1393 = vld [vmem:[#allocation2 + $0x26] sm:$0xff]
      %v1394 = vld [vmem:[#allocation2 + $0x2e] sm:$0xff]
      %v1395 = vld [vmem:[#allocation2 + $0x36] sm:$0xff]
      %v1396 = vld [vmem:[#allocation2 + $0x3e] sm:$0xff]
      %v1397 = vsel %vm575, %v1389, 0.0
      %v1398 = vsel %vm576, %v1390, 0.0
      %v1399 = vsel %vm577, %v1391, 0.0
      %v1400 = vsel %vm578, %v1392, 0.0
      %v1401 = vsel %vm579, %v1393, 0.0
      %v1402 = vsel %vm580, %v1394, 0.0
      %v1403 = vsel %vm581, %v1395, 0.0
      %v1404 = vsel %vm582, %v1396, 0.0
      %v1405 = vpack.c.bf16 %v1398, %v1397
      %v1406 = vpack.c.bf16 %v1400, %v1399
      %v1407 = vpack.c.bf16 %v1402, %v1401
      %v1408 = vpack.c.bf16 %v1404, %v1403
      %s1409 = scalar_lea.vmem %s7, 8
      %v1410 = vld [vmem:[%s1409] sm:$0xf]
      %v1411 = vld [vmem:[%s1409 + $0x4] sm:$0xf]
      %v1414 = vunpack.c.l.b16 %v1410
      %v1415 = vunpack.c.l.b16 %v1411
      %v1416 = vpack.c.b16 %v1415, %v1414
      %v1419 = vsel %vm549, %v1405, 0
      %v1422 = vsel %vm549, %v1406, 0
      %v1425 = vsel %vm549, %v1407, 0
      %v1428 = vsel %vm549, %v1408, 0
      %1430 = vmatprep.subr.bf16.mxu0 0
      %1431 = vmatpush1.bf16.msra.mxu0 %v1416
      %1432 = vmatprep.subr.bf16.mxu0 0
      %1433 = vmatpush1.bf16.msra.mxu0 0
      %1434 = vmatprep.subr.bf16.mxu0 0
      %1435 = vmatpush1.bf16.msra.mxu0 0
      %1436 = vmatprep.subr.bf16.mxu0 0
      %1437 = vmatpush1.bf16.msra.mxu0 0
      %1438 = vmatprep.subr.bf16.mxu0 0
      %1439 = vmatpush1.bf16.msra.mxu0 0
      %1440 = vmatprep.subr.bf16.mxu0 0
      %1441 = vmatpush1.bf16.msra.mxu0 0
      %1442 = vmatprep.subr.bf16.mxu0 0
      %1443 = vmatpush1.bf16.msra.mxu0 0
      %1444 = vmatprep.subr.bf16.mxu0 0
      %1445 = vmatpush1.bf16.msra.mxu0 0
      %1446 = vmatprep.subr.bf16.mxu0 0
      %1447 = vmatpush1.bf16.msra.mxu0 0
      %1448 = vmatprep.subr.bf16.mxu0 0
      %1449 = vmatpush1.bf16.msra.mxu0 0
      %1450 = vmatprep.subr.bf16.mxu0 0
      %1451 = vmatpush1.bf16.msra.mxu0 0
      %1452 = vmatprep.subr.bf16.mxu0 0
      %1453 = vmatpush1.bf16.msra.mxu0 0
      %1454 = vmatprep.subr.bf16.mxu0 0
      %1455 = vmatpush1.bf16.msra.mxu0 0
      %1456 = vmatprep.subr.bf16.mxu0 0
      %1457 = vmatpush1.bf16.msra.mxu0 0
      %1458 = vmatprep.subr.bf16.mxu0 0
      %1459 = vmatpush1.bf16.msra.mxu0 0
      %1460 = vmatprep.subr.bf16.mxu0 0
      %1461 = vmatpush1.bf16.msra.mxu0 0
      %1462 = vmatprep.mubr.bf16.mxu0 0
      %1463 = vmatmul.mubr.bf16.gmra.mrb[0].mxu0 %v1419
      %v1464 = vpop.f32.mrb[0].mxu0
      %v1465 = vadd.f32 0.0, %v1464
      %v1466 = vpop.f32.mrb[0].mxu0
      %v1467 = vpop.f32.mrb[0].mxu0
      %v1468 = vadd.f32 0.0, %v1467
      %v1469 = vpop.f32.mrb[0].mxu0
      %1470 = vmatprep.mubr.bf16.mxu0 0
      %1471 = vmatmul.mubr.bf16.gmra.mrb[0].mxu0 %v1422
      %v1472 = vpop.f32.mrb[0].mxu0
      %v1473 = vadd.f32 0.0, %v1472
      %v1474 = vpop.f32.mrb[0].mxu0
      %v1475 = vpop.f32.mrb[0].mxu0
      %v1476 = vadd.f32 0.0, %v1475
      %v1477 = vpop.f32.mrb[0].mxu0
      %1478 = vmatprep.mubr.bf16.mxu0 0
      %1479 = vmatmul.mubr.bf16.gmra.mrb[0].mxu0 %v1425
      %v1480 = vpop.f32.mrb[0].mxu0
      %v1481 = vadd.f32 0.0, %v1480
      %v1482 = vpop.f32.mrb[0].mxu0
      %v1483 = vpop.f32.mrb[0].mxu0
      %v1484 = vadd.f32 0.0, %v1483
      %v1485 = vpop.f32.mrb[0].mxu0
      %1486 = vmatprep.mubr.bf16.mxu0 0
      %1487 = vmatmul.mubr.bf16.gmra.mrb[0].mxu0 %v1428
      %v1488 = vpop.f32.mrb[0].mxu0
      %v1489 = vadd.f32 0.0, %v1488
      %v1490 = vpop.f32.mrb[0].mxu0
      %v1491 = vpop.f32.mrb[0].mxu0
      %v1492 = vadd.f32 0.0, %v1491
      %v1493 = vpop.f32.mrb[0].mxu0
      %1494 = vdwg.mxu0
      %v1497 = vunpack.c.l.b16 %v1387
      %v1498 = vunpack.c.l.b16 %v1388
      %v1499 = vpack.c.b16 %v1498, %v1497
      %v1502 = vsel %vm549, %v1383, 0
      %v1505 = vsel %vm549, %v1384, 0
      %v1508 = vsel %vm549, %v1385, 0
      %v1511 = vsel %vm549, %v1386, 0
      %1513 = vmatprep.subr.bf16.mxu0 0
      %1514 = vmatpush1.bf16.msra.mxu0 %v1499
      %1515 = vmatprep.subr.bf16.mxu0 0
      %1516 = vmatpush1.bf16.msra.mxu0 0
      %1517 = vmatprep.subr.bf16.mxu0 0
      %1518 = vmatpush1.bf16.msra.mxu0 0
      %1519 = vmatprep.subr.bf16.mxu0 0
      %1520 = vmatpush1.bf16.msra.mxu0 0
      %1521 = vmatprep.subr.bf16.mxu0 0
      %1522 = vmatpush1.bf16.msra.mxu0 0
      %1523 = vmatprep.subr.bf16.mxu0 0
      %1524 = vmatpush1.bf16.msra.mxu0 0
      %1525 = vmatprep.subr.bf16.mxu0 0
      %1526 = vmatpush1.bf16.msra.mxu0 0
      %1527 = vmatprep.subr.bf16.mxu0 0
      %1528 = vmatpush1.bf16.msra.mxu0 0
      %1529 = vmatprep.subr.bf16.mxu0 0
      %1530 = vmatpush1.bf16.msra.mxu0 0
      %1531 = vmatprep.subr.bf16.mxu0 0
      %1532 = vmatpush1.bf16.msra.mxu0 0
      %1533 = vmatprep.subr.bf16.mxu0 0
      %1534 = vmatpush1.bf16.msra.mxu0 0
      %1535 = vmatprep.subr.bf16.mxu0 0
      %1536 = vmatpush1.bf16.msra.mxu0 0
      %1537 = vmatprep.subr.bf16.mxu0 0
      %1538 = vmatpush1.bf16.msra.mxu0 0
      %1539 = vmatprep.subr.bf16.mxu0 0
      %1540 = vmatpush1.bf16.msra.mxu0 0
      %1541 = vmatprep.subr.bf16.mxu0 0
      %1542 = vmatpush1.bf16.msra.mxu0 0
      %1543 = vmatprep.subr.bf16.mxu0 0
      %1544 = vmatpush1.bf16.msra.mxu0 0
      %1545 = vmatprep.mubr.bf16.mxu0 0
      %1546 = vmatmul.mubr.bf16.gmra.mrb[0].mxu0 %v1502
      %v1547 = vpop.f32.mrb[0].mxu0
      %v1548 = vadd.f32 %v1465, %v1547
      %v1549 = vpop.f32.mrb[0].mxu0
      %v1550 = vpop.f32.mrb[0].mxu0
      %v1551 = vadd.f32 %v1468, %v1550
      %v1552 = vpop.f32.mrb[0].mxu0
      %1553 = vmatprep.mubr.bf16.mxu0 0
      %1554 = vmatmul.mubr.bf16.gmra.mrb[0].mxu0 %v1505
      %v1555 = vpop.f32.mrb[0].mxu0
      %v1556 = vadd.f32 %v1473, %v1555
      %v1557 = vpop.f32.mrb[0].mxu0
      %v1558 = vpop.f32.mrb[0].mxu0
      %v1559 = vadd.f32 %v1476, %v1558
      %v1560 = vpop.f32.mrb[0].mxu0
      %1561 = vmatprep.mubr.bf16.mxu0 0
      %1562 = vmatmul.mubr.bf16.gmra.mrb[0].mxu0 %v1508
      %v1563 = vpop.f32.mrb[0].mxu0
      %v1564 = vadd.f32 %v1481, %v1563
      %v1565 = vpop.f32.mrb[0].mxu0
      %v1566 = vpop.f32.mrb[0].mxu0
      %v1567 = vadd.f32 %v1484, %v1566
      %v1568 = vpop.f32.mrb[0].mxu0
      %1569 = vmatprep.mubr.bf16.mxu0 0
      %1570 = vmatmul.mubr.bf16.gmra.mrb[0].mxu0 %v1511
      %v1571 = vpop.f32.mrb[0].mxu0
      %v1572 = vadd.f32 %v1489, %v1571
      %v1573 = vpop.f32.mrb[0].mxu0
      %v1574 = vpop.f32.mrb[0].mxu0
      %v1575 = vadd.f32 %v1492, %v1574
      %v1576 = vpop.f32.mrb[0].mxu0
      %1577 = vdwg.mxu0
      %v1578 = vpack.c.bf16 %v1344, %v1343
      %v1579 = vpack.c.bf16 %v1346, %v1345
      %v1580 = vpack.c.bf16 %v1348, %v1347
      %v1581 = vpack.c.bf16 %v1350, %v1349
      %s1582 = scalar_lea.vmem %s7, 16
      %v1583 = vld [vmem:[%s1582] sm:$0xf]
      %v1584 = vld [vmem:[%s1582 + $0x4] sm:$0xf]
      %v1587 = vunpack.c.l.b16 %v1583
      %v1588 = vunpack.c.l.b16 %v1584
      %v1589 = vpack.c.b16 %v1588, %v1587
      %v1592 = vsel %vm549, %v1578, 0
      %v1595 = vsel %vm549, %v1579, 0
      %v1598 = vsel %vm549, %v1580, 0
      %v1601 = vsel %vm549, %v1581, 0
      %1603 = vmatprep.subr.bf16.mxu0 0
      %1604 = vmatpush1.bf16.msra.mxu0 %v1589
      %1605 = vmatprep.subr.bf16.mxu0 0
      %1606 = vmatpush1.bf16.msra.mxu0 0
      %1607 = vmatprep.subr.bf16.mxu0 0
      %1608 = vmatpush1.bf16.msra.mxu0 0
      %1609 = vmatprep.subr.bf16.mxu0 0
      %1610 = vmatpush1.bf16.msra.mxu0 0
      %1611 = vmatprep.subr.bf16.mxu0 0
      %1612 = vmatpush1.bf16.msra.mxu0 0
      %1613 = vmatprep.subr.bf16.mxu0 0
      %1614 = vmatpush1.bf16.msra.mxu0 0
      %1615 = vmatprep.subr.bf16.mxu0 0
      %1616 = vmatpush1.bf16.msra.mxu0 0
      %1617 = vmatprep.subr.bf16.mxu0 0
      %1618 = vmatpush1.bf16.msra.mxu0 0
      %1619 = vmatprep.subr.bf16.mxu0 0
      %1620 = vmatpush1.bf16.msra.mxu0 0
      %1621 = vmatprep.subr.bf16.mxu0 0
      %1622 = vmatpush1.bf16.msra.mxu0 0
      %1623 = vmatprep.subr.bf16.mxu0 0
      %1624 = vmatpush1.bf16.msra.mxu0 0
      %1625 = vmatprep.subr.bf16.mxu0 0
      %1626 = vmatpush1.bf16.msra.mxu0 0
      %1627 = vmatprep.subr.bf16.mxu0 0
      %1628 = vmatpush1.bf16.msra.mxu0 0
      %1629 = vmatprep.subr.bf16.mxu0 0
      %1630 = vmatpush1.bf16.msra.mxu0 0
      %1631 = vmatprep.subr.bf16.mxu0 0
      %1632 = vmatpush1.bf16.msra.mxu0 0
      %1633 = vmatprep.subr.bf16.mxu0 0
      %1634 = vmatpush1.bf16.msra.mxu0 0
      %1635 = vmatprep.mubr.bf16.mxu0 0
      %1636 = vmatmul.mubr.bf16.gmra.mrb[0].mxu0 %v1592
      %v1637 = vpop.f32.mrb[0].mxu0
      %v1638 = vadd.f32 0.0, %v1637
      %v1639 = vpop.f32.mrb[0].mxu0
      %v1640 = vpop.f32.mrb[0].mxu0
      %v1641 = vadd.f32 0.0, %v1640
      %v1642 = vpop.f32.mrb[0].mxu0
      %1643 = vmatprep.mubr.bf16.mxu0 0
      %1644 = vmatmul.mubr.bf16.gmra.mrb[0].mxu0 %v1595
      %v1645 = vpop.f32.mrb[0].mxu0
      %v1646 = vadd.f32 0.0, %v1645
      %v1647 = vpop.f32.mrb[0].mxu0
      %v1648 = vpop.f32.mrb[0].mxu0
      %v1649 = vadd.f32 0.0, %v1648
      %v1650 = vpop.f32.mrb[0].mxu0
      %1651 = vmatprep.mubr.bf16.mxu0 0
      %1652 = vmatmul.mubr.bf16.gmra.mrb[0].mxu0 %v1598
      %v1653 = vpop.f32.mrb[0].mxu0
      %v1654 = vadd.f32 0.0, %v1653
      %v1655 = vpop.f32.mrb[0].mxu0
      %v1656 = vpop.f32.mrb[0].mxu0
      %v1657 = vadd.f32 0.0, %v1656
      %v1658 = vpop.f32.mrb[0].mxu0
      %1659 = vmatprep.mubr.bf16.mxu0 0
      %1660 = vmatmul.mubr.bf16.gmra.mrb[0].mxu0 %v1601
      %v1661 = vpop.f32.mrb[0].mxu0
      %v1662 = vadd.f32 0.0, %v1661
      %v1663 = vpop.f32.mrb[0].mxu0
      %v1664 = vpop.f32.mrb[0].mxu0
      %v1665 = vadd.f32 0.0, %v1664
      %v1666 = vpop.f32.mrb[0].mxu0
      %1667 = vdwg.mxu0
      %v1668 = vadd.f32 %v1548, %v1638
      %v1669 = vadd.f32 %v1551, %v1641
      %v1670 = vadd.f32 %v1556, %v1646
      %v1671 = vadd.f32 %v1559, %v1649
      %v1672 = vadd.f32 %v1564, %v1654
      %v1673 = vadd.f32 %v1567, %v1657
      %v1674 = vadd.f32 %v1572, %v1662
      %v1675 = vadd.f32 %v1575, %v1665
      %v1676 = vld [vmem:[%s8] sm:$0x1]
      %v1678 = vlaneseq
      %v1679 = vshrl.u32 %v1678, 7
      %v1680 = vsub.s32 0, %v1679
      %v1681 = vrot.slane %v1676, %v1680
      %v1683 = vadd.f32 %v1668, %v1681
      %v1684 = vadd.f32 %v1669, %v1681
      %v1685 = vadd.f32 %v1670, %v1681
      %v1686 = vadd.f32 %v1671, %v1681
      %v1687 = vadd.f32 %v1672, %v1681
      %v1688 = vadd.f32 %v1673, %v1681
      %v1689 = vadd.f32 %v1674, %v1681
      %v1690 = vadd.f32 %v1675, %v1681
      %v1691 = vmax.f32 %v1683, 0.0
      %v1692 = vmax.f32 %v1684, 0.0
      %v1693 = vmax.f32 %v1685, 0.0
      %v1694 = vmax.f32 %v1686, 0.0
      %v1695 = vmax.f32 %v1687, 0.0
      %v1696 = vmax.f32 %v1688, 0.0
      %v1697 = vmax.f32 %v1689, 0.0
      %v1698 = vmax.f32 %v1690, 0.0
      %1699 = vst.msk [vmem:[#allocation2 + $0x8] sm:$0xff] %vm549, %v1691
      %1700 = vst.msk [vmem:[#allocation2 + $0x10] sm:$0xff] %vm549, %v1692
      %1701 = vst.msk [vmem:[#allocation2 + $0x18] sm:$0xff] %vm549, %v1693
      %1702 = vst.msk [vmem:[#allocation2 + $0x20] sm:$0xff] %vm549, %v1694
      %1703 = vst.msk [vmem:[#allocation2 + $0x28] sm:$0xff] %vm549, %v1695
      %1704 = vst.msk [vmem:[#allocation2 + $0x30] sm:$0xff] %vm549, %v1696
      %1705 = vst.msk [vmem:[#allocation2 + $0x38] sm:$0xff] %vm549, %v1697
      %1706 = vst.msk [vmem:[#allocation2 + $0x40] sm:$0xff] %vm549, %v1698
      %v1707 = vld [vmem:[#allocation2 + $0x4] sm:$0xff]
      %v1708 = vld [vmem:[#allocation2 + $0xc] sm:$0xff]
      %v1709 = vld [vmem:[#allocation2 + $0x14] sm:$0xff]
      %v1710 = vld [vmem:[#allocation2 + $0x1c] sm:$0xff]
      %v1711 = vld [vmem:[#allocation2 + $0x24] sm:$0xff]
      %v1712 = vld [vmem:[#allocation2 + $0x2c] sm:$0xff]
      %v1713 = vld [vmem:[#allocation2 + $0x34] sm:$0xff]
      %v1714 = vld [vmem:[#allocation2 + $0x3c] sm:$0xff]
      %v1715 = vsel %vm1367, %v1707, 0.0
      %v1716 = vsel %vm1368, %v1708, 0.0
      %v1717 = vsel %vm1369, %v1709, 0.0
      %v1718 = vsel %vm1370, %v1710, 0.0
      %v1719 = vsel %vm1371, %v1711, 0.0
      %v1720 = vsel %vm1372, %v1712, 0.0
      %v1721 = vsel %vm1373, %v1713, 0.0
      %v1722 = vsel %vm1374, %v1714, 0.0
      %v1723 = vpack.c.bf16 %v1716, %v1715
      %v1724 = vpack.c.bf16 %v1718, %v1717
      %v1725 = vpack.c.bf16 %v1720, %v1719
      %v1726 = vpack.c.bf16 %v1722, %v1721
      %v1727 = vld [vmem:[%s9] sm:$0xf]
      %v1728 = vld [vmem:[%s9 + $0x4] sm:$0xf]
      %v1729 = vld [vmem:[#allocation2 + $0x6] sm:$0xff]
      %v1730 = vld [vmem:[#allocation2 + $0xe] sm:$0xff]
      %v1731 = vld [vmem:[#allocation2 + $0x16] sm:$0xff]
      %v1732 = vld [vmem:[#allocation2 + $0x1e] sm:$0xff]
      %v1733 = vld [vmem:[#allocation2 + $0x26] sm:$0xff]
      %v1734 = vld [vmem:[#allocation2 + $0x2e] sm:$0xff]
      %v1735 = vld [vmem:[#allocation2 + $0x36] sm:$0xff]
      %v1736 = vld [vmem:[#allocation2 + $0x3e] sm:$0xff]
      %v1737 = vsel %vm575, %v1729, 0.0
      %v1738 = vsel %vm576, %v1730, 0.0
      %v1739 = vsel %vm577, %v1731, 0.0
      %v1740 = vsel %vm578, %v1732, 0.0
      %v1741 = vsel %vm579, %v1733, 0.0
      %v1742 = vsel %vm580, %v1734, 0.0
      %v1743 = vsel %vm581, %v1735, 0.0
      %v1744 = vsel %vm582, %v1736, 0.0
      %v1745 = vpack.c.bf16 %v1738, %v1737
      %v1746 = vpack.c.bf16 %v1740, %v1739
      %v1747 = vpack.c.bf16 %v1742, %v1741
      %v1748 = vpack.c.bf16 %v1744, %v1743
      %s1749 = scalar_lea.vmem %s9, 8
      %v1750 = vld [vmem:[%s1749] sm:$0xf]
      %v1751 = vld [vmem:[%s1749 + $0x4] sm:$0xf]
      %v1754 = vunpack.c.l.b16 %v1750
      %v1755 = vunpack.c.l.b16 %v1751
      %v1756 = vpack.c.b16 %v1755, %v1754
      %v1759 = vsel %vm549, %v1745, 0
      %v1762 = vsel %vm549, %v1746, 0
      %v1765 = vsel %vm549, %v1747, 0
      %v1768 = vsel %vm549, %v1748, 0
      %1770 = vmatprep.subr.bf16.mxu0 0
      %1771 = vmatpush1.bf16.msra.mxu0 %v1756
      %1772 = vmatprep.subr.bf16.mxu0 0
      %1773 = vmatpush1.bf16.msra.mxu0 0
      %1774 = vmatprep.subr.bf16.mxu0 0
      %1775 = vmatpush1.bf16.msra.mxu0 0
      %1776 = vmatprep.subr.bf16.mxu0 0
      %1777 = vmatpush1.bf16.msra.mxu0 0
      %1778 = vmatprep.subr.bf16.mxu0 0
      %1779 = vmatpush1.bf16.msra.mxu0 0
      %1780 = vmatprep.subr.bf16.mxu0 0
      %1781 = vmatpush1.bf16.msra.mxu0 0
      %1782 = vmatprep.subr.bf16.mxu0 0
      %1783 = vmatpush1.bf16.msra.mxu0 0
      %1784 = vmatprep.subr.bf16.mxu0 0
      %1785 = vmatpush1.bf16.msra.mxu0 0
      %1786 = vmatprep.subr.bf16.mxu0 0
      %1787 = vmatpush1.bf16.msra.mxu0 0
      %1788 = vmatprep.subr.bf16.mxu0 0
      %1789 = vmatpush1.bf16.msra.mxu0 0
      %1790 = vmatprep.subr.bf16.mxu0 0
      %1791 = vmatpush1.bf16.msra.mxu0 0
      %1792 = vmatprep.subr.bf16.mxu0 0
      %1793 = vmatpush1.bf16.msra.mxu0 0
      %1794 = vmatprep.subr.bf16.mxu0 0
      %1795 = vmatpush1.bf16.msra.mxu0 0
      %1796 = vmatprep.subr.bf16.mxu0 0
      %1797 = vmatpush1.bf16.msra.mxu0 0
      %1798 = vmatprep.subr.bf16.mxu0 0
      %1799 = vmatpush1.bf16.msra.mxu0 0
      %1800 = vmatprep.subr.bf16.mxu0 0
      %1801 = vmatpush1.bf16.msra.mxu0 0
      %1802 = vmatprep.mubr.bf16.mxu0 0
      %1803 = vmatmul.mubr.bf16.gmra.mrb[0].mxu0 %v1759
      %v1804 = vpop.f32.mrb[0].mxu0
      %v1805 = vadd.f32 0.0, %v1804
      %v1806 = vpop.f32.mrb[0].mxu0
      %v1807 = vpop.f32.mrb[0].mxu0
      %v1808 = vadd.f32 0.0, %v1807
      %v1809 = vpop.f32.mrb[0].mxu0
      %1810 = vmatprep.mubr.bf16.mxu0 0
      %1811 = vmatmul.mubr.bf16.gmra.mrb[0].mxu0 %v1762
      %v1812 = vpop.f32.mrb[0].mxu0
      %v1813 = vadd.f32 0.0, %v1812
      %v1814 = vpop.f32.mrb[0].mxu0
      %v1815 = vpop.f32.mrb[0].mxu0
      %v1816 = vadd.f32 0.0, %v1815
      %v1817 = vpop.f32.mrb[0].mxu0
      %1818 = vmatprep.mubr.bf16.mxu0 0
      %1819 = vmatmul.mubr.bf16.gmra.mrb[0].mxu0 %v1765
      %v1820 = vpop.f32.mrb[0].mxu0
      %v1821 = vadd.f32 0.0, %v1820
      %v1822 = vpop.f32.mrb[0].mxu0
      %v1823 = vpop.f32.mrb[0].mxu0
      %v1824 = vadd.f32 0.0, %v1823
      %v1825 = vpop.f32.mrb[0].mxu0
      %1826 = vmatprep.mubr.bf16.mxu0 0
      %1827 = vmatmul.mubr.bf16.gmra.mrb[0].mxu0 %v1768
      %v1828 = vpop.f32.mrb[0].mxu0
      %v1829 = vadd.f32 0.0, %v1828
      %v1830 = vpop.f32.mrb[0].mxu0
      %v1831 = vpop.f32.mrb[0].mxu0
      %v1832 = vadd.f32 0.0, %v1831
      %v1833 = vpop.f32.mrb[0].mxu0
      %1834 = vdwg.mxu0
      %v1837 = vunpack.c.l.b16 %v1727
      %v1838 = vunpack.c.l.b16 %v1728
      %v1839 = vpack.c.b16 %v1838, %v1837
      %v1842 = vsel %vm549, %v1723, 0
      %v1845 = vsel %vm549, %v1724, 0
      %v1848 = vsel %vm549, %v1725, 0
      %v1851 = vsel %vm549, %v1726, 0
      %1853 = vmatprep.subr.bf16.mxu0 0
      %1854 = vmatpush1.bf16.msra.mxu0 %v1839
      %1855 = vmatprep.subr.bf16.mxu0 0
      %1856 = vmatpush1.bf16.msra.mxu0 0
      %1857 = vmatprep.subr.bf16.mxu0 0
      %1858 = vmatpush1.bf16.msra.mxu0 0
      %1859 = vmatprep.subr.bf16.mxu0 0
      %1860 = vmatpush1.bf16.msra.mxu0 0
      %1861 = vmatprep.subr.bf16.mxu0 0
      %1862 = vmatpush1.bf16.msra.mxu0 0
      %1863 = vmatprep.subr.bf16.mxu0 0
      %1864 = vmatpush1.bf16.msra.mxu0 0
      %1865 = vmatprep.subr.bf16.mxu0 0
      %1866 = vmatpush1.bf16.msra.mxu0 0
      %1867 = vmatprep.subr.bf16.mxu0 0
      %1868 = vmatpush1.bf16.msra.mxu0 0
      %1869 = vmatprep.subr.bf16.mxu0 0
      %1870 = vmatpush1.bf16.msra.mxu0 0
      %1871 = vmatprep.subr.bf16.mxu0 0
      %1872 = vmatpush1.bf16.msra.mxu0 0
      %1873 = vmatprep.subr.bf16.mxu0 0
      %1874 = vmatpush1.bf16.msra.mxu0 0
      %1875 = vmatprep.subr.bf16.mxu0 0
      %1876 = vmatpush1.bf16.msra.mxu0 0
      %1877 = vmatprep.subr.bf16.mxu0 0
      %1878 = vmatpush1.bf16.msra.mxu0 0
      %1879 = vmatprep.subr.bf16.mxu0 0
      %1880 = vmatpush1.bf16.msra.mxu0 0
      %1881 = vmatprep.subr.bf16.mxu0 0
      %1882 = vmatpush1.bf16.msra.mxu0 0
      %1883 = vmatprep.subr.bf16.mxu0 0
      %1884 = vmatpush1.bf16.msra.mxu0 0
      %1885 = vmatprep.mubr.bf16.mxu0 0
      %1886 = vmatmul.mubr.bf16.gmra.mrb[0].mxu0 %v1842
      %v1887 = vpop.f32.mrb[0].mxu0
      %v1888 = vadd.f32 %v1805, %v1887
      %v1889 = vpop.f32.mrb[0].mxu0
      %v1890 = vpop.f32.mrb[0].mxu0
      %v1891 = vadd.f32 %v1808, %v1890
      %v1892 = vpop.f32.mrb[0].mxu0
      %1893 = vmatprep.mubr.bf16.mxu0 0
      %1894 = vmatmul.mubr.bf16.gmra.mrb[0].mxu0 %v1845
      %v1895 = vpop.f32.mrb[0].mxu0
      %v1896 = vadd.f32 %v1813, %v1895
      %v1897 = vpop.f32.mrb[0].mxu0
      %v1898 = vpop.f32.mrb[0].mxu0
      %v1899 = vadd.f32 %v1816, %v1898
      %v1900 = vpop.f32.mrb[0].mxu0
      %1901 = vmatprep.mubr.bf16.mxu0 0
      %1902 = vmatmul.mubr.bf16.gmra.mrb[0].mxu0 %v1848
      %v1903 = vpop.f32.mrb[0].mxu0
      %v1904 = vadd.f32 %v1821, %v1903
      %v1905 = vpop.f32.mrb[0].mxu0
      %v1906 = vpop.f32.mrb[0].mxu0
      %v1907 = vadd.f32 %v1824, %v1906
      %v1908 = vpop.f32.mrb[0].mxu0
      %1909 = vmatprep.mubr.bf16.mxu0 0
      %1910 = vmatmul.mubr.bf16.gmra.mrb[0].mxu0 %v1851
      %v1911 = vpop.f32.mrb[0].mxu0
      %v1912 = vadd.f32 %v1829, %v1911
      %v1913 = vpop.f32.mrb[0].mxu0
      %v1914 = vpop.f32.mrb[0].mxu0
      %v1915 = vadd.f32 %v1832, %v1914
      %v1916 = vpop.f32.mrb[0].mxu0
      %1917 = vdwg.mxu0
      %v1918 = vpack.c.bf16 %v1692, %v1691
      %v1919 = vpack.c.bf16 %v1694, %v1693
      %v1920 = vpack.c.bf16 %v1696, %v1695
      %v1921 = vpack.c.bf16 %v1698, %v1697
      %s1922 = scalar_lea.vmem %s9, 16
      %v1923 = vld [vmem:[%s1922] sm:$0xf]
      %v1924 = vld [vmem:[%s1922 + $0x4] sm:$0xf]
      %v1927 = vunpack.c.l.b16 %v1923
      %v1928 = vunpack.c.l.b16 %v1924
      %v1929 = vpack.c.b16 %v1928, %v1927
      %v1932 = vsel %vm549, %v1918, 0
      %v1935 = vsel %vm549, %v1919, 0
      %v1938 = vsel %vm549, %v1920, 0
      %v1941 = vsel %vm549, %v1921, 0
      %1943 = vmatprep.subr.bf16.mxu0 0
      %1944 = vmatpush1.bf16.msra.mxu0 %v1929
      %1945 = vmatprep.subr.bf16.mxu0 0
      %1946 = vmatpush1.bf16.msra.mxu0 0
      %1947 = vmatprep.subr.bf16.mxu0 0
      %1948 = vmatpush1.bf16.msra.mxu0 0
      %1949 = vmatprep.subr.bf16.mxu0 0
      %1950 = vmatpush1.bf16.msra.mxu0 0
      %1951 = vmatprep.subr.bf16.mxu0 0
      %1952 = vmatpush1.bf16.msra.mxu0 0
      %1953 = vmatprep.subr.bf16.mxu0 0
      %1954 = vmatpush1.bf16.msra.mxu0 0
      %1955 = vmatprep.subr.bf16.mxu0 0
      %1956 = vmatpush1.bf16.msra.mxu0 0
      %1957 = vmatprep.subr.bf16.mxu0 0
      %1958 = vmatpush1.bf16.msra.mxu0 0
      %1959 = vmatprep.subr.bf16.mxu0 0
      %1960 = vmatpush1.bf16.msra.mxu0 0
      %1961 = vmatprep.subr.bf16.mxu0 0
      %1962 = vmatpush1.bf16.msra.mxu0 0
      %1963 = vmatprep.subr.bf16.mxu0 0
      %1964 = vmatpush1.bf16.msra.mxu0 0
      %1965 = vmatprep.subr.bf16.mxu0 0
      %1966 = vmatpush1.bf16.msra.mxu0 0
      %1967 = vmatprep.subr.bf16.mxu0 0
      %1968 = vmatpush1.bf16.msra.mxu0 0
      %1969 = vmatprep.subr.bf16.mxu0 0
      %1970 = vmatpush1.bf16.msra.mxu0 0
      %1971 = vmatprep.subr.bf16.mxu0 0
      %1972 = vmatpush1.bf16.msra.mxu0 0
      %1973 = vmatprep.subr.bf16.mxu0 0
      %1974 = vmatpush1.bf16.msra.mxu0 0
      %1975 = vmatprep.mubr.bf16.mxu0 0
      %1976 = vmatmul.mubr.bf16.gmra.mrb[0].mxu0 %v1932
      %v1977 = vpop.f32.mrb[0].mxu0
      %v1978 = vadd.f32 0.0, %v1977
      %v1979 = vpop.f32.mrb[0].mxu0
      %v1980 = vpop.f32.mrb[0].mxu0
      %v1981 = vadd.f32 0.0, %v1980
      %v1982 = vpop.f32.mrb[0].mxu0
      %1983 = vmatprep.mubr.bf16.mxu0 0
      %1984 = vmatmul.mubr.bf16.gmra.mrb[0].mxu0 %v1935
      %v1985 = vpop.f32.mrb[0].mxu0
      %v1986 = vadd.f32 0.0, %v1985
      %v1987 = vpop.f32.mrb[0].mxu0
      %v1988 = vpop.f32.mrb[0].mxu0
      %v1989 = vadd.f32 0.0, %v1988
      %v1990 = vpop.f32.mrb[0].mxu0
      %1991 = vmatprep.mubr.bf16.mxu0 0
      %1992 = vmatmul.mubr.bf16.gmra.mrb[0].mxu0 %v1938
      %v1993 = vpop.f32.mrb[0].mxu0
      %v1994 = vadd.f32 0.0, %v1993
      %v1995 = vpop.f32.mrb[0].mxu0
      %v1996 = vpop.f32.mrb[0].mxu0
      %v1997 = vadd.f32 0.0, %v1996
      %v1998 = vpop.f32.mrb[0].mxu0
      %1999 = vmatprep.mubr.bf16.mxu0 0
      %2000 = vmatmul.mubr.bf16.gmra.mrb[0].mxu0 %v1941
      %v2001 = vpop.f32.mrb[0].mxu0
      %v2002 = vadd.f32 0.0, %v2001
      %v2003 = vpop.f32.mrb[0].mxu0
      %v2004 = vpop.f32.mrb[0].mxu0
      %v2005 = vadd.f32 0.0, %v2004
      %v2006 = vpop.f32.mrb[0].mxu0
      %2007 = vdwg.mxu0
      %v2008 = vadd.f32 %v1888, %v1978
      %v2009 = vadd.f32 %v1891, %v1981
      %v2010 = vadd.f32 %v1896, %v1986
      %v2011 = vadd.f32 %v1899, %v1989
      %v2012 = vadd.f32 %v1904, %v1994
      %v2013 = vadd.f32 %v1907, %v1997
      %v2014 = vadd.f32 %v1912, %v2002
      %v2015 = vadd.f32 %v1915, %v2005
      %v2016 = vld [vmem:[%s10] sm:$0x1]
      %v2018 = vlaneseq
      %v2019 = vshrl.u32 %v2018, 7
      %v2020 = vsub.s32 0, %v2019
      %v2021 = vrot.slane %v2016, %v2020
      %v2023 = vadd.f32 %v2008, %v2021
      %v2024 = vadd.f32 %v2009, %v2021
      %v2025 = vadd.f32 %v2010, %v2021
      %v2026 = vadd.f32 %v2011, %v2021
      %v2027 = vadd.f32 %v2012, %v2021
      %v2028 = vadd.f32 %v2013, %v2021
      %v2029 = vadd.f32 %v2014, %v2021
      %v2030 = vadd.f32 %v2015, %v2021
      %v2031 = vmax.f32 %v2023, 0.0
      %v2032 = vmax.f32 %v2024, 0.0
      %v2033 = vmax.f32 %v2025, 0.0
      %v2034 = vmax.f32 %v2026, 0.0
      %v2035 = vmax.f32 %v2027, 0.0
      %v2036 = vmax.f32 %v2028, 0.0
      %v2037 = vmax.f32 %v2029, 0.0
      %v2038 = vmax.f32 %v2030, 0.0
      %v2039 = vadd.f32 %v2031, %v1343
      %v2040 = vadd.f32 %v2032, %v1344
      %v2041 = vadd.f32 %v2033, %v1345
      %v2042 = vadd.f32 %v2034, %v1346
      %v2043 = vadd.f32 %v2035, %v1347
      %v2044 = vadd.f32 %v2036, %v1348
      %v2045 = vadd.f32 %v2037, %v1349
      %v2046 = vadd.f32 %v2038, %v1350
      %v2047 = vmax.f32 %v2039, 0.0
      %v2048 = vmax.f32 %v2040, 0.0
      %v2049 = vmax.f32 %v2041, 0.0
      %v2050 = vmax.f32 %v2042, 0.0
      %v2051 = vmax.f32 %v2043, 0.0
      %v2052 = vmax.f32 %v2044, 0.0
      %v2053 = vmax.f32 %v2045, 0.0
      %v2054 = vmax.f32 %v2046, 0.0
      %v2055 = vpack.c.bf16 %v2048, %v2047
      %v2056 = vpack.c.bf16 %v2050, %v2049
      %v2057 = vpack.c.bf16 %v2052, %v2051
      %v2058 = vpack.c.bf16 %v2054, %v2053
      %v2059 = vld [vmem:[%s11] sm:$0xf]
      %v2060 = vld [vmem:[%s11 + $0x4] sm:$0xf]
      %v2061 = vld [vmem:[%s12] sm:$0x1]
      %v2063 = vlaneseq
      %v2064 = vshrl.u32 %v2063, 7
      %v2065 = vsub.s32 0, %v2064
      %v2066 = vrot.slane %v2061, %v2065
      %v2070 = vunpack.c.l.b16 %v2059
      %v2071 = vunpack.c.l.b16 %v2060
      %v2072 = vpack.c.b16 %v2071, %v2070
      %v2075 = vsel %vm549, %v2055, 0
      %v2078 = vsel %vm549, %v2056, 0
      %v2081 = vsel %vm549, %v2057, 0
      %v2084 = vsel %vm549, %v2058, 0
      %2086 = vmatprep.subr.bf16.mxu0 0
      %2087 = vmatpush1.bf16.msra.mxu0 %v2072
      %2088 = vmatprep.subr.bf16.mxu0 0
      %2089 = vmatpush1.bf16.msra.mxu0 0
      %2090 = vmatprep.subr.bf16.mxu0 0
      %2091 = vmatpush1.bf16.msra.mxu0 0
      %2092 = vmatprep.subr.bf16.mxu0 0
      %2093 = vmatpush1.bf16.msra.mxu0 0
      %2094 = vmatprep.subr.bf16.mxu0 0
      %2095 = vmatpush1.bf16.msra.mxu0 0
      %2096 = vmatprep.subr.bf16.mxu0 0
      %2097 = vmatpush1.bf16.msra.mxu0 0
      %2098 = vmatprep.subr.bf16.mxu0 0
      %2099 = vmatpush1.bf16.msra.mxu0 0
      %2100 = vmatprep.subr.bf16.mxu0 0
      %2101 = vmatpush1.bf16.msra.mxu0 0
      %2102 = vmatprep.subr.bf16.mxu0 0
      %2103 = vmatpush1.bf16.msra.mxu0 0
      %2104 = vmatprep.subr.bf16.mxu0 0
      %2105 = vmatpush1.bf16.msra.mxu0 0
      %2106 = vmatprep.subr.bf16.mxu0 0
      %2107 = vmatpush1.bf16.msra.mxu0 0
      %2108 = vmatprep.subr.bf16.mxu0 0
      %2109 = vmatpush1.bf16.msra.mxu0 0
      %2110 = vmatprep.subr.bf16.mxu0 0
      %2111 = vmatpush1.bf16.msra.mxu0 0
      %2112 = vmatprep.subr.bf16.mxu0 0
      %2113 = vmatpush1.bf16.msra.mxu0 0
      %2114 = vmatprep.subr.bf16.mxu0 0
      %2115 = vmatpush1.bf16.msra.mxu0 0
      %2116 = vmatprep.subr.bf16.mxu0 0
      %2117 = vmatpush1.bf16.msra.mxu0 0
      %2118 = vmatprep.mubr.bf16.mxu0 0
      %2119 = vmatmul.mubr.bf16.gmra.mrb[0].mxu0 %v2075
      %v2120 = vpop.f32.mrb[0].mxu0
      %v2121 = vadd.f32 %v2066, %v2120
      %v2122 = vpop.f32.mrb[0].mxu0
      %v2123 = vpop.f32.mrb[0].mxu0
      %v2124 = vadd.f32 %v2066, %v2123
      %v2125 = vpop.f32.mrb[0].mxu0
      %2126 = vmatprep.mubr.bf16.mxu0 0
      %2127 = vmatmul.mubr.bf16.gmra.mrb[0].mxu0 %v2078
      %v2128 = vpop.f32.mrb[0].mxu0
      %v2129 = vadd.f32 %v2066, %v2128
      %v2130 = vpop.f32.mrb[0].mxu0
      %v2131 = vpop.f32.mrb[0].mxu0
      %v2132 = vadd.f32 %v2066, %v2131
      %v2133 = vpop.f32.mrb[0].mxu0
      %2134 = vmatprep.mubr.bf16.mxu0 0
      %2135 = vmatmul.mubr.bf16.gmra.mrb[0].mxu0 %v2081
      %v2136 = vpop.f32.mrb[0].mxu0
      %v2137 = vadd.f32 %v2066, %v2136
      %v2138 = vpop.f32.mrb[0].mxu0
      %v2139 = vpop.f32.mrb[0].mxu0
      %v2140 = vadd.f32 %v2066, %v2139
      %v2141 = vpop.f32.mrb[0].mxu0
      %2142 = vmatprep.mubr.bf16.mxu0 0
      %2143 = vmatmul.mubr.bf16.gmra.mrb[0].mxu0 %v2084
      %v2144 = vpop.f32.mrb[0].mxu0
      %v2145 = vadd.f32 %v2066, %v2144
      %v2146 = vpop.f32.mrb[0].mxu0
      %v2147 = vpop.f32.mrb[0].mxu0
      %v2148 = vadd.f32 %v2066, %v2147
      %v2149 = vpop.f32.mrb[0].mxu0
      %2150 = vdwg.mxu0
      %2151 = vst [vmem:[%s442] sm:$0xff] %v2121
      %2152 = vst [vmem:[%s442 + $0x8] sm:$0xff] %v2124
      %2153 = vst [vmem:[%s442 + $0x10] sm:$0xff] %v2129
      %2154 = vst [vmem:[%s442 + $0x18] sm:$0xff] %v2132
      %2155 = vst [vmem:[%s442 + $0x20] sm:$0xff] %v2137
      %2156 = vst [vmem:[%s442 + $0x28] sm:$0xff] %v2140
      %2157 = vst [vmem:[%s442 + $0x30] sm:$0xff] %v2145
      %2158 = vst [vmem:[%s442 + $0x38] sm:$0xff] %v2148
      %p2159 = scmp.lt.s32.totalorder %s24, 1
      %s2160 = scalar_select %p2159, %s24, 1
      %s2161 = smul.addr %s2160, 8
      %s2162 = smul.addr %s2161, 8
      %s2163 = scalar_lea.vmem %s13, %s2162
      // Predicated region
      $region73: #{tcn_model_forward.1} parent=71 // pred_check
        %p2164 = pneg %p320
      $region74: #{tcn_model_forward.1} parent=71 // pred_check_branch
        %2166 = sbr.rel (%p2164) target = $region76
      $region75: #{tcn_model_forward.1} parent=71 // pred_region
        _
      $region76: #{tcn_model_forward.1} parent=71 // pred_fallthru
        _
    $region72: #{tcn_model_forward.1} parent=5 // pred_fallthru
      _
    %p2167 = scmp.le.s32.totalorder 2, %s19
    // Predicated region
    $region77: #{tcn_model_forward.1} parent=5 // pred_check
      %p2168 = pneg %p2167
    $region78: #{tcn_model_forward.1} parent=5 // pred_check_branch
      %2170 = sbr.rel (%p2168) target = $region80
    $region79: #{tcn_model_forward.1} parent=5 // pred_region
      %s2171 = ssub.s32 %s19, 2
      // Predicated region
      $region81: #{tcn_model_forward.1} parent=79 // pred_check
        %p2172 = pneg %p326
      $region82: #{tcn_model_forward.1} parent=79 // pred_check_branch
        %2174 = sbr.rel (%p2172) target = $region84
      $region83: #{tcn_model_forward.1} parent=79 // pred_region
        %p2175 = scmp.lt.s32.totalorder %s25, 1
        %s2176 = scalar_select %p2175, %s25, 1
        %s2177 = smul.addr %s2176, 8
        %s2178 = smul.addr %s2177, 8
        %s2179 = scalar_lea.vmem %s13, %s2178
      $region84: #{tcn_model_forward.1} parent=79 // pred_fallthru
        _
    $region80: #{tcn_model_forward.1} parent=5 // pred_fallthru
      _
  $region6: #{tcn_model_forward.1} parent=0 // loop_footer
    %s23 = sadd.s32 1, %s19
  $region7: #{tcn_model_forward.1} parent=0 // loop_footer_branch
    %18 = sbr.rel target = $region3
  $region8: #{tcn_model_forward.1} parent=0 // loop_exit
    _

</llo_original>
